<compile_context>
chip_gen: v5e
topology: v5e:2x2
jax: 0.10.0
libtpu: 0.0.40
codegen_flags: <defaults>
</compile_context>

<pallas_src>
import functools

import numpy as np
import jax
import jax.numpy as jnp
from jax.experimental import pallas as pl
from jax.experimental.pallas import tpu as pltpu


def _yolo_kernel(x_ref, w_ref, b_ref, px_ref, py_ref, sc_ref, av_ref, pos_ref,
                 *rest, n_anchors, n_classes):
    """One (batch, spatial-tile) step.

    x_ref  : (1, Cin, T)  activations; lane axis = flattened spatial positions
    w_ref  : (Cout, Cin)  1x1-conv weight
    b_ref  : (Cout, 1)    bias
    px_ref : (Cout, 1)    1/W on x rows, else 0
    py_ref : (Cout, 1)    1/H on y rows, else 0
    sc_ref : (Cout, 1)    sigmoid coefficient: 1/W (x), 1/H (y), 1 (obj), else 0
    av_ref : (Cout, 1)    anchor_w/W on w rows, anchor_h/H on h rows, else 0
    pos_ref: (2, T)       row 0 = grid-cell x, row 1 = grid-cell y
    rest   : n_anchors per-anchor class-row masks (Cout, 1), then o_ref (1, Cout, T)
    """
    amask_refs = rest[:n_anchors]
    o_ref = rest[n_anchors]

    x = x_ref[0]                                               # (Cin, T)
    logits = jnp.dot(w_ref[...], x,
                     preferred_element_type=jnp.float32) + b_ref[...]

    sig = jax.nn.sigmoid(logits)                               # x / y / obj rows

    # Per-anchor (grouped) max of the class rows; zero on all non-class rows.
    if n_classes > 0:
        cols = [r[...] for r in amask_refs]                    # (Cout, 1) 0/1
        is_cls = cols[0]
        for c in cols[1:]:
            is_cls = is_cls + c
        mshift = None
        for col in cols:
            m_a = jnp.max(jnp.where(col > 0.0, logits, -jnp.inf),
                          axis=0, keepdims=True)               # (1, T)
            term = col * m_a
            mshift = term if mshift is None else mshift + term
    else:
        mshift = 0.0

    # Single full-tile exp: on w/h rows mshift == 0 (plain exp for the box
    # decode); on class rows it is the max-shifted, numerically safe exp.
    # The clamp keeps rows whose decode coefficient is 0 from ever producing
    # inf * 0 = NaN.
    ex = jnp.exp(jnp.minimum(logits - mshift, 80.0))

    gx = pos_ref[0:1, :]                                       # (1, T)
    gy = pos_ref[1:2, :]
    out = (px_ref[...] * gx + py_ref[...] * gy
           + sc_ref[...] * sig + av_ref[...] * ex)             # 0 on class rows

    if n_classes > 0:
        e = jnp.where(is_cls > 0.0, ex, 0.0)
        denom = None
        for col in cols:
            s_a = jnp.sum(col * e, axis=0, keepdims=True)      # per-anchor sum
            term = col * s_a
            denom = term if denom is None else denom + term
        denom = denom + (1.0 - is_cls)                         # 1 on non-class rows
        # Exact divide (full-precision EUP op) -- the approximate reciprocal's
        # ~2^-8 relative error was the source of the previous check failures.
        out = out + e / denom

    o_ref[0] = out.astype(o_ref.dtype)


def _pick_spatial_tile(hw):
    # Full extent for small heads (a "full dim" block is always legal, even if
    # not a multiple of 128); otherwise the largest 128-multiple divisor, with
    # a masked tail block as the fallback.
    if hw <= 1024:
        return hw
    for t in (1024, 512, 384, 256, 128):
        if hw % t == 0:
            return t
    return 512  # non-divisible: Pallas masks the boundary block


def yolo_output_pallas(features_nchw, weight, bias, anchors, n_classes,
                       training=False, spatial_tile=None):
    """Pallas TPU implementation of YoloOutput.forward.

    features_nchw: (B, Cin, H, W) float32 (PyTorch NCHW layout, used as-is)
    weight       : (Cout, Cin, 1, 1) float32 torch Conv2d weight, Cout=A*(5+nc)
    bias         : (Cout,) float32
    anchors      : (A, 2) anchor sizes (module constants, not traced)
    """
    B, Cin, H, W = features_nchw.shape
    anchors_np = np.asarray(anchors, dtype=np.float32)
    A = anchors_np.shape[0]
    C = 5 + n_classes
    Cout = A * C
    assert weight.shape == (Cout, Cin, 1, 1)
    HW = H * W

    T = spatial_tile if spatial_tile is not None else _pick_spatial_tile(HW)
    num_t = pl.cdiv(HW, T)

    # ---- free reshapes only: no NCHW->NHWC transpose / extra HBM pass ----
    x = features_nchw.reshape(B, Cin, HW)
    w_mat = weight.reshape(Cout, Cin)
    b_col = bias.reshape(Cout, 1).astype(jnp.float32)

    # ---- host-side (trace-time) constant tables, hoisted out of the kernel ----
    ch = np.arange(Cout)
    within = ch % C            # position inside a (5 + n_classes) anchor block
    a_of = ch // C             # anchor index of each channel
    px = np.where(within == 0, 1.0 / W, 0.0).reshape(Cout, 1).astype(np.float32)
    py = np.where(within == 1, 1.0 / H, 0.0).reshape(Cout, 1).astype(np.float32)
    sig_coef = np.select(
        [within == 0, within == 1, within == 4],
        [1.0 / W, 1.0 / H, 1.0], 0.0).reshape(Cout, 1).astype(np.float32)
    av = np.select(
        [within == 2, within == 3],
        [anchors_np[a_of, 0] / W, anchors_np[a_of, 1] / H],
        0.0).reshape(Cout, 1).astype(np.float32)
    amasks = [((a_of == a) & (within >= 5)).astype(np.float32).reshape(Cout, 1)
              for a in range(A)]
    gx = (np.arange(HW) % W).astype(np.float32)
    gy = (np.arange(HW) // W).astype(np.float32)
    pos = np.stack([gx, gy], axis=0)                           # (2, HW)

    col_spec = pl.BlockSpec((Cout, 1), lambda b, t: (0, 0))
    kernel = functools.partial(_yolo_kernel, n_anchors=A, n_classes=n_classes)

    out = pl.pallas_call(
        kernel,
        out_shape=jax.ShapeDtypeStruct((B, Cout, HW), jnp.float32),
        grid_spec=pltpu.PrefetchScalarGridSpec(
            num_scalar_prefetch=0,
            grid=(B, num_t),
            in_specs=[
                pl.BlockSpec((1, Cin, T), lambda b, t: (b, 0, t)),   # activations
                pl.BlockSpec((Cout, Cin), lambda b, t: (0, 0)),      # conv weight
                col_spec,                                            # bias
                col_spec, col_spec, col_spec, col_spec,              # px, py, sc, av
                pl.BlockSpec((2, T), lambda b, t: (0, t)),           # grid positions
            ] + [col_spec] * A,                                      # anchor class masks
            out_specs=pl.BlockSpec((1, Cout, T), lambda b, t: (b, 0, t)),
        ),
        compiler_params=pltpu.CompilerParams(
            dimension_semantics=("parallel", "parallel"),
            vmem_limit_bytes=32 * 1024 * 1024),
    )(x, w_mat, b_col,
      jnp.asarray(px), jnp.asarray(py), jnp.asarray(sig_coef), jnp.asarray(av),
      jnp.asarray(pos), *[jnp.asarray(m) for m in amasks])

    # (B, Cout, HW) is exactly torch's conv-output layout; the permute below is
    # identical to torch's reshape + permute(0, 3, 4, 1, 2).
    boxes = out.reshape(B, A, C, H, W)
    boxes = jnp.transpose(boxes, (0, 3, 4, 1, 2))              # (B, H, W, A, C)
    if not training:
        boxes = boxes.reshape(B, A * H * W, C)                 # eval-mode reshape
    return boxes


def yolo_output_ref(features, weight, bias, anchors, n_classes, training=False):
    """Pure-JAX reference mirroring the PyTorch module."""
    B, Cin, H, W = features.shape
    A = anchors.shape[0]
    C = 5 + n_classes
    grid = jnp.einsum("bchw,oc->bohw", features, weight.reshape(A * C, Cin),
                      precision=jax.lax.Precision.HIGHEST) \
        + bias[None, :, None, None]
    g = grid.reshape(B, A, C, H, W)
    gy, gx = jnp.meshgrid(jnp.arange(H), jnp.arange(W), indexing="ij")
    x = (gx + jax.nn.sigmoid(g[:, :, 0])) / W
    y = (gy + jax.nn.sigmoid(g[:, :, 1])) / H
    w = anchors[:, 0][None, :, None, None] * jnp.exp(g[:, :, 2]) / W
    h = anchors[:, 1][None, :, None, None] * jnp.exp(g[:, :, 3]) / H
    obj = jax.nn.sigmoid(g[:, :, 4])
    cls = jax.nn.softmax(g[:, :, 5:], axis=2)
    boxes = jnp.concatenate(
        [x[:, :, None], y[:, :, None], w[:, :, None], h[:, :, None],
         obj[:, :, None], cls], axis=2)
    boxes = jnp.transpose(boxes, (0, 3, 4, 1, 2))
    if not training:
        boxes = boxes.reshape(B, A * H * W, C)
    return boxes


if __name__ == "__main__":
    key = jax.random.PRNGKey(0)
    B, Cin, H, W = 2, 16, 16, 16
    n_classes = 4
    anchors = jnp.array([[10.0, 13.0], [16.0, 30.0], [33.0, 23.0]], jnp.float32)
    A = anchors.shape[0]
    Cout = A * (5 + n_classes)

    k1, k2, k3 = jax.random.split(key, 3)
    features = jax.random.normal(k1, (B, Cin, H, W), jnp.float32)
    weight = jax.random.normal(k2, (Cout, Cin, 1, 1), jnp.float32) * 0.1
    bias = jax.random.normal(k3, (Cout,), jnp.float32) * 0.1

    # eval mode (includes the (B, A*H*W, 5+nc) reshape)
    out = yolo_output_pallas(features, weight, bias, anchors, n_classes,
                             training=False)
    out = jax.block_until_ready(out)
    ref = yolo_output_ref(features, weight, bias, anchors, n_classes,
                          training=False)
    np.testing.assert_allclose(np.asarray(out), np.asarray(ref),
                               rtol=1e-3, atol=1e-3)

    # training mode (returns (B, H, W, A, 5+nc))
    out_tr = yolo_output_pallas(features, weight, bias, anchors, n_classes,
                                training=True)
    out_tr = jax.block_until_ready(out_tr)
    ref_tr = yolo_output_ref(features, weight, bias, anchors, n_classes,
                             training=True)
    np.testing.assert_allclose(np.asarray(out_tr), np.asarray(ref_tr),
                               rtol=1e-3, atol=1e-3)

    print("KERNEL_OK")
</pallas_src>

<mosaic_0001>
module attributes {stable_mosaic.version = 11 : i64} {
  func.func @_yolo_kernel(%arg0: i32, %arg1: i32, %arg2: memref<1x16x256xf32, #tpu.memory_space<vmem>>, %arg3: memref<27x16xf32, #tpu.memory_space<vmem>>, %arg4: memref<27x1xf32, #tpu.memory_space<vmem>>, %arg5: memref<27x1xf32, #tpu.memory_space<vmem>>, %arg6: memref<27x1xf32, #tpu.memory_space<vmem>>, %arg7: memref<27x1xf32, #tpu.memory_space<vmem>>, %arg8: memref<27x1xf32, #tpu.memory_space<vmem>>, %arg9: memref<2x256xf32, #tpu.memory_space<vmem>>, %arg10: memref<27x1xf32, #tpu.memory_space<vmem>>, %arg11: memref<27x1xf32, #tpu.memory_space<vmem>>, %arg12: memref<27x1xf32, #tpu.memory_space<vmem>>, %arg13: memref<1x27x256xf32, #tpu.memory_space<vmem>>) attributes {dimension_semantics = [#tpu.dimension_semantics<parallel>, #tpu.dimension_semantics<parallel>], iteration_bounds = array<i64: 2, 1>, scalar_prefetch = 0 : i64, scratch_operands = 0 : i64, tpu.core_type = #tpu.core_type<tc>, window_params = [{transform_indices = @transform_0, window_bounds = array<i64: 1, 16, 256>}, {pipeline_mode = #tpu.pipeline_mode<synchronous>, transform_indices = @transform_1, window_bounds = array<i64: 27, 16>}, {pipeline_mode = #tpu.pipeline_mode<synchronous>, transform_indices = @transform_2, window_bounds = array<i64: 27, 1>}, {pipeline_mode = #tpu.pipeline_mode<synchronous>, transform_indices = @transform_3, window_bounds = array<i64: 27, 1>}, {pipeline_mode = #tpu.pipeline_mode<synchronous>, transform_indices = @transform_4, window_bounds = array<i64: 27, 1>}, {pipeline_mode = #tpu.pipeline_mode<synchronous>, transform_indices = @transform_5, window_bounds = array<i64: 27, 1>}, {pipeline_mode = #tpu.pipeline_mode<synchronous>, transform_indices = @transform_6, window_bounds = array<i64: 27, 1>}, {transform_indices = @transform_7, window_bounds = array<i64: 2, 256>}, {pipeline_mode = #tpu.pipeline_mode<synchronous>, transform_indices = @transform_8, window_bounds = array<i64: 27, 1>}, {pipeline_mode = #tpu.pipeline_mode<synchronous>, transform_indices = @transform_9, window_bounds = array<i64: 27, 1>}, {pipeline_mode = #tpu.pipeline_mode<synchronous>, transform_indices = @transform_10, window_bounds = array<i64: 27, 1>}, {transform_indices = @transform_11, window_bounds = array<i64: 1, 27, 256>}]} {
    %c0 = arith.constant 0 : index
    %c0_0 = arith.constant 0 : index
    %c0_1 = arith.constant 0 : index
    %0 = vector.load %arg2[%c0, %c0_0, %c0_1] : memref<1x16x256xf32, #tpu.memory_space<vmem>>, vector<1x16x256xf32>
    %1 = vector.shape_cast %0 : vector<1x16x256xf32> to vector<16x256xf32>
    %c0_2 = arith.constant 0 : index
    %c0_3 = arith.constant 0 : index
    %2 = vector.load %arg3[%c0_2, %c0_3] : memref<27x16xf32, #tpu.memory_space<vmem>>, vector<27x16xf32>
    %cst = arith.constant dense<0.000000e+00> : vector<27x256xf32>
    %3 = tpu.matmul %2, %1, %cst {dimension_numbers = #tpu.dot_dimension_numbers<[1], [0], [0], [1], [0, 0, 1, 1], [], []>} : vector<27x16xf32>, vector<16x256xf32>, vector<27x256xf32> -> vector<27x256xf32>
    %c0_4 = arith.constant 0 : index
    %c0_5 = arith.constant 0 : index
    %4 = vector.load %arg4[%c0_4, %c0_5] : memref<27x1xf32, #tpu.memory_space<vmem>>, vector<27x1xf32>
    %5 = vector.broadcast %4 : vector<27x1xf32> to vector<27x256xf32>
    %6 = arith.addf %3, %5 : vector<27x256xf32>
    %7 = arith.negf %6 : vector<27x256xf32>
    %8 = math.exp %7 : vector<27x256xf32>
    %cst_6 = arith.constant 1.000000e+00 : f32
    %9 = vector.broadcast %cst_6 : f32 to vector<27x256xf32>
    %10 = arith.addf %9, %8 : vector<27x256xf32>
    %11 = arith.divf %9, %10 : vector<27x256xf32>
    %c0_7 = arith.constant 0 : index
    %c0_8 = arith.constant 0 : index
    %12 = vector.load %arg10[%c0_7, %c0_8] : memref<27x1xf32, #tpu.memory_space<vmem>>, vector<27x1xf32>
    %c0_9 = arith.constant 0 : index
    %c0_10 = arith.constant 0 : index
    %13 = vector.load %arg11[%c0_9, %c0_10] : memref<27x1xf32, #tpu.memory_space<vmem>>, vector<27x1xf32>
    %c0_11 = arith.constant 0 : index
    %c0_12 = arith.constant 0 : index
    %14 = vector.load %arg12[%c0_11, %c0_12] : memref<27x1xf32, #tpu.memory_space<vmem>>, vector<27x1xf32>
    %15 = arith.addf %12, %13 : vector<27x1xf32>
    %16 = arith.addf %15, %14 : vector<27x1xf32>
    %cst_13 = arith.constant 0.000000e+00 : f32
    %17 = vector.broadcast %cst_13 : f32 to vector<27x1xf32>
    %18 = arith.cmpf ogt, %12, %17 : vector<27x1xf32>
    %cst_14 = arith.constant 0xFF800000 : f32
    %19 = vector.shape_cast %18 : vector<27x1xi1> to vector<27x1xi1>
    %20 = vector.broadcast %19 : vector<27x1xi1> to vector<27x256xi1>
    %21 = vector.broadcast %cst_14 : f32 to vector<27x256xf32>
    %22 = arith.select %20, %6, %21 : vector<27x256xi1>, vector<27x256xf32>
    %cst_15 = arith.constant dense<0xFF800000> : vector<256xf32>
    %23 = vector.multi_reduction <maximumf>, %22, %cst_15 [0] : vector<27x256xf32> to vector<256xf32>
    %24 = vector.shape_cast %23 : vector<256xf32> to vector<1x256xf32>
    %25 = vector.broadcast %12 : vector<27x1xf32> to vector<27x256xf32>
    %26 = vector.broadcast %24 : vector<1x256xf32> to vector<27x256xf32>
    %27 = arith.mulf %25, %26 : vector<27x256xf32>
    %cst_16 = arith.constant 0.000000e+00 : f32
    %28 = vector.broadcast %cst_16 : f32 to vector<27x1xf32>
    %29 = arith.cmpf ogt, %13, %28 : vector<27x1xf32>
    %cst_17 = arith.constant 0xFF800000 : f32
    %30 = vector.shape_cast %29 : vector<27x1xi1> to vector<27x1xi1>
    %31 = vector.broadcast %30 : vector<27x1xi1> to vector<27x256xi1>
    %32 = vector.broadcast %cst_17 : f32 to vector<27x256xf32>
    %33 = arith.select %31, %6, %32 : vector<27x256xi1>, vector<27x256xf32>
    %cst_18 = arith.constant dense<0xFF800000> : vector<256xf32>
    %34 = vector.multi_reduction <maximumf>, %33, %cst_18 [0] : vector<27x256xf32> to vector<256xf32>
    %35 = vector.shape_cast %34 : vector<256xf32> to vector<1x256xf32>
    %36 = vector.broadcast %13 : vector<27x1xf32> to vector<27x256xf32>
    %37 = vector.broadcast %35 : vector<1x256xf32> to vector<27x256xf32>
    %38 = arith.mulf %36, %37 : vector<27x256xf32>
    %39 = arith.addf %27, %38 : vector<27x256xf32>
    %cst_19 = arith.constant 0.000000e+00 : f32
    %40 = vector.broadcast %cst_19 : f32 to vector<27x1xf32>
    %41 = arith.cmpf ogt, %14, %40 : vector<27x1xf32>
    %cst_20 = arith.constant 0xFF800000 : f32
    %42 = vector.shape_cast %41 : vector<27x1xi1> to vector<27x1xi1>
    %43 = vector.broadcast %42 : vector<27x1xi1> to vector<27x256xi1>
    %44 = vector.broadcast %cst_20 : f32 to vector<27x256xf32>
    %45 = arith.select %43, %6, %44 : vector<27x256xi1>, vector<27x256xf32>
    %cst_21 = arith.constant dense<0xFF800000> : vector<256xf32>
    %46 = vector.multi_reduction <maximumf>, %45, %cst_21 [0] : vector<27x256xf32> to vector<256xf32>
    %47 = vector.shape_cast %46 : vector<256xf32> to vector<1x256xf32>
    %48 = vector.broadcast %14 : vector<27x1xf32> to vector<27x256xf32>
    %49 = vector.broadcast %47 : vector<1x256xf32> to vector<27x256xf32>
    %50 = arith.mulf %48, %49 : vector<27x256xf32>
    %51 = arith.addf %39, %50 : vector<27x256xf32>
    %52 = arith.subf %6, %51 : vector<27x256xf32>
    %cst_22 = arith.constant 8.000000e+01 : f32
    %53 = vector.broadcast %cst_22 : f32 to vector<27x256xf32>
    %54 = arith.minimumf %52, %53 : vector<27x256xf32>
    %55 = math.exp %54 : vector<27x256xf32>
    %c0_23 = arith.constant 0 : index
    %c0_24 = arith.constant 0 : index
    %56 = vector.load %arg9[%c0_23, %c0_24] : memref<2x256xf32, #tpu.memory_space<vmem>>, vector<1x256xf32>
    %c1 = arith.constant 1 : index
    %c0_25 = arith.constant 0 : index
    %57 = vector.load %arg9[%c1, %c0_25] : memref<2x256xf32, #tpu.memory_space<vmem>>, vector<1x256xf32>
    %c0_26 = arith.constant 0 : index
    %c0_27 = arith.constant 0 : index
    %58 = vector.load %arg5[%c0_26, %c0_27] : memref<27x1xf32, #tpu.memory_space<vmem>>, vector<27x1xf32>
    %59 = vector.broadcast %58 : vector<27x1xf32> to vector<27x256xf32>
    %60 = vector.broadcast %56 : vector<1x256xf32> to vector<27x256xf32>
    %61 = arith.mulf %59, %60 : vector<27x256xf32>
    %c0_28 = arith.constant 0 : index
    %c0_29 = arith.constant 0 : index
    %62 = vector.load %arg6[%c0_28, %c0_29] : memref<27x1xf32, #tpu.memory_space<vmem>>, vector<27x1xf32>
    %63 = vector.broadcast %62 : vector<27x1xf32> to vector<27x256xf32>
    %64 = vector.broadcast %57 : vector<1x256xf32> to vector<27x256xf32>
    %65 = arith.mulf %63, %64 : vector<27x256xf32>
    %66 = arith.addf %61, %65 : vector<27x256xf32>
    %c0_30 = arith.constant 0 : index
    %c0_31 = arith.constant 0 : index
    %67 = vector.load %arg7[%c0_30, %c0_31] : memref<27x1xf32, #tpu.memory_space<vmem>>, vector<27x1xf32>
    %68 = vector.broadcast %67 : vector<27x1xf32> to vector<27x256xf32>
    %69 = arith.mulf %68, %11 : vector<27x256xf32>
    %70 = arith.addf %66, %69 : vector<27x256xf32>
    %c0_32 = arith.constant 0 : index
    %c0_33 = arith.constant 0 : index
    %71 = vector.load %arg8[%c0_32, %c0_33] : memref<27x1xf32, #tpu.memory_space<vmem>>, vector<27x1xf32>
    %72 = vector.broadcast %71 : vector<27x1xf32> to vector<27x256xf32>
    %73 = arith.mulf %72, %55 : vector<27x256xf32>
    %74 = arith.addf %70, %73 : vector<27x256xf32>
    %cst_34 = arith.constant 0.000000e+00 : f32
    %75 = vector.broadcast %cst_34 : f32 to vector<27x1xf32>
    %76 = arith.cmpf ogt, %16, %75 : vector<27x1xf32>
    %cst_35 = arith.constant 0.000000e+00 : f32
    %77 = vector.shape_cast %76 : vector<27x1xi1> to vector<27x1xi1>
    %78 = vector.broadcast %77 : vector<27x1xi1> to vector<27x256xi1>
    %79 = vector.broadcast %cst_35 : f32 to vector<27x256xf32>
    %80 = arith.select %78, %55, %79 : vector<27x256xi1>, vector<27x256xf32>
    %81 = vector.broadcast %12 : vector<27x1xf32> to vector<27x256xf32>
    %82 = arith.mulf %81, %80 : vector<27x256xf32>
    %cst_36 = arith.constant dense<0.000000e+00> : vector<256xf32>
    %83 = vector.multi_reduction <add>, %82, %cst_36 [0] : vector<27x256xf32> to vector<256xf32>
    %84 = vector.shape_cast %83 : vector<256xf32> to vector<1x256xf32>
    %85 = vector.broadcast %12 : vector<27x1xf32> to vector<27x256xf32>
    %86 = vector.broadcast %84 : vector<1x256xf32> to vector<27x256xf32>
    %87 = arith.mulf %85, %86 : vector<27x256xf32>
    %88 = vector.broadcast %13 : vector<27x1xf32> to vector<27x256xf32>
    %89 = arith.mulf %88, %80 : vector<27x256xf32>
    %cst_37 = arith.constant dense<0.000000e+00> : vector<256xf32>
    %90 = vector.multi_reduction <add>, %89, %cst_37 [0] : vector<27x256xf32> to vector<256xf32>
    %91 = vector.shape_cast %90 : vector<256xf32> to vector<1x256xf32>
    %92 = vector.broadcast %13 : vector<27x1xf32> to vector<27x256xf32>
    %93 = vector.broadcast %91 : vector<1x256xf32> to vector<27x256xf32>
    %94 = arith.mulf %92, %93 : vector<27x256xf32>
    %95 = arith.addf %87, %94 : vector<27x256xf32>
    %96 = vector.broadcast %14 : vector<27x1xf32> to vector<27x256xf32>
    %97 = arith.mulf %96, %80 : vector<27x256xf32>
    %cst_38 = arith.constant dense<0.000000e+00> : vector<256xf32>
    %98 = vector.multi_reduction <add>, %97, %cst_38 [0] : vector<27x256xf32> to vector<256xf32>
    %99 = vector.shape_cast %98 : vector<256xf32> to vector<1x256xf32>
    %100 = vector.broadcast %14 : vector<27x1xf32> to vector<27x256xf32>
    %101 = vector.broadcast %99 : vector<1x256xf32> to vector<27x256xf32>
    %102 = arith.mulf %100, %101 : vector<27x256xf32>
    %103 = arith.addf %95, %102 : vector<27x256xf32>
    %cst_39 = arith.constant 1.000000e+00 : f32
    %104 = vector.broadcast %cst_39 : f32 to vector<27x1xf32>
    %105 = arith.subf %104, %16 : vector<27x1xf32>
    %106 = vector.broadcast %105 : vector<27x1xf32> to vector<27x256xf32>
    %107 = arith.addf %103, %106 : vector<27x256xf32>
    %108 = arith.divf %80, %107 : vector<27x256xf32>
    %109 = arith.addf %74, %108 : vector<27x256xf32>
    %c0_40 = arith.constant 0 : index
    %c0_41 = arith.constant 0 : index
    %c0_42 = arith.constant 0 : index
    %110 = vector.load %arg13[%c0_40, %c0_41, %c0_42] : memref<1x27x256xf32, #tpu.memory_space<vmem>>, vector<1x27x256xf32>
    %111 = vector.shape_cast %110 : vector<1x27x256xf32> to vector<27x256xf32>
    %112 = vector.shape_cast %109 : vector<27x256xf32> to vector<1x27x256xf32>
    tpu.vector_store %arg13[%c0_40, %c0_41, %c0_42], %112 {strides = array<i32>} : memref<1x27x256xf32, #tpu.memory_space<vmem>>, vector<1x27x256xf32>,
    return
  }
  func.func @transform_0(%arg0: i32, %arg1: i32) -> (i32, i32, i32) {
    %c0_i32 = arith.constant 0 : i32
    %c0_i32_0 = arith.constant 0 : i32
    return %arg0, %c0_i32, %arg1 : i32, i32, i32
  }
  func.func @transform_1(%arg0: i32, %arg1: i32) -> (i32, i32) {
    %c0_i32 = arith.constant 0 : i32
    %c0_i32_0 = arith.constant 0 : i32
    %c0_i32_1 = arith.constant 0 : i32
    return %c0_i32, %c0_i32_0 : i32, i32
  }
  func.func @transform_2(%arg0: i32, %arg1: i32) -> (i32, i32) {
    %c0_i32 = arith.constant 0 : i32
    %c0_i32_0 = arith.constant 0 : i32
    %c0_i32_1 = arith.constant 0 : i32
    return %c0_i32, %c0_i32_0 : i32, i32
  }
  func.func @transform_3(%arg0: i32, %arg1: i32) -> (i32, i32) {
    %c0_i32 = arith.constant 0 : i32
    %c0_i32_0 = arith.constant 0 : i32
    %c0_i32_1 = arith.constant 0 : i32
    return %c0_i32, %c0_i32_0 : i32, i32
  }
  func.func @transform_4(%arg0: i32, %arg1: i32) -> (i32, i32) {
    %c0_i32 = arith.constant 0 : i32
    %c0_i32_0 = arith.constant 0 : i32
    %c0_i32_1 = arith.constant 0 : i32
    return %c0_i32, %c0_i32_0 : i32, i32
  }
  func.func @transform_5(%arg0: i32, %arg1: i32) -> (i32, i32) {
    %c0_i32 = arith.constant 0 : i32
    %c0_i32_0 = arith.constant 0 : i32
    %c0_i32_1 = arith.constant 0 : i32
    return %c0_i32, %c0_i32_0 : i32, i32
  }
  func.func @transform_6(%arg0: i32, %arg1: i32) -> (i32, i32) {
    %c0_i32 = arith.constant 0 : i32
    %c0_i32_0 = arith.constant 0 : i32
    %c0_i32_1 = arith.constant 0 : i32
    return %c0_i32, %c0_i32_0 : i32, i32
  }
  func.func @transform_7(%arg0: i32, %arg1: i32) -> (i32, i32) {
    %c0_i32 = arith.constant 0 : i32
    %c0_i32_0 = arith.constant 0 : i32
    return %c0_i32, %arg1 : i32, i32
  }
  func.func @transform_8(%arg0: i32, %arg1: i32) -> (i32, i32) {
    %c0_i32 = arith.constant 0 : i32
    %c0_i32_0 = arith.constant 0 : i32
    %c0_i32_1 = arith.constant 0 : i32
    return %c0_i32, %c0_i32_0 : i32, i32
  }
  func.func @transform_9(%arg0: i32, %arg1: i32) -> (i32, i32) {
    %c0_i32 = arith.constant 0 : i32
    %c0_i32_0 = arith.constant 0 : i32
    %c0_i32_1 = arith.constant 0 : i32
    return %c0_i32, %c0_i32_0 : i32, i32
  }
  func.func @transform_10(%arg0: i32, %arg1: i32) -> (i32, i32) {
    %c0_i32 = arith.constant 0 : i32
    %c0_i32_0 = arith.constant 0 : i32
    %c0_i32_1 = arith.constant 0 : i32
    return %c0_i32, %c0_i32_0 : i32, i32
  }
  func.func @transform_11(%arg0: i32, %arg1: i32) -> (i32, i32, i32) {
    %c0_i32 = arith.constant 0 : i32
    %c0_i32_0 = arith.constant 0 : i32
    return %arg0, %c0_i32, %arg1 : i32, i32, i32
  }
}

</mosaic_0001>

<llo_original>
// kernel: tpu_custom_call.1
$region0: #{tpu_custom_call.1}
  #allocation0 [shape = 'u32[]', space=smem, size = 0x4, offset = 0x4, fixed_abs, tag = 'smem constant byte address 0x4 - core index']
  #allocation1 [shape = 'u32[72,128]{1,0:T(1,128)}', space=vmem, size = 0x9000, scoped, tag = 'internal scratch']
  %s0 = inlined_call_operand.vmem [shape: f32[2,16,256], index: 0, kind: input, shape index: {}]
  %s1 = inlined_call_operand.vmem [shape: f32[27,16], index: 1, kind: input, shape index: {}]
  %s2 = inlined_call_operand.vmem [shape: f32[27,1], index: 2, kind: input, shape index: {}]
  %s3 = inlined_call_operand.vmem [shape: f32[27,1], index: 3, kind: input, shape index: {}]
  %s4 = inlined_call_operand.vmem [shape: f32[27,1], index: 4, kind: input, shape index: {}]
  %s5 = inlined_call_operand.vmem [shape: f32[27,1], index: 5, kind: input, shape index: {}]
  %s6 = inlined_call_operand.vmem [shape: f32[27,1], index: 6, kind: input, shape index: {}]
  %s7 = inlined_call_operand.vmem [shape: f32[2,256], index: 7, kind: input, shape index: {}]
  %s8 = inlined_call_operand.vmem [shape: f32[27,1], index: 8, kind: input, shape index: {}]
  %s9 = inlined_call_operand.vmem [shape: f32[27,1], index: 9, kind: input, shape index: {}]
  %s10 = inlined_call_operand.vmem [shape: f32[27,1], index: 10, kind: input, shape index: {}]
  %s11 = inlined_call_operand.vmem [shape: f32[2,27,256], index: 11, kind: output, shape index: {}]
  %s12 = sld [smem:[#allocation0]]
  $region77: #{tpu_custom_call.1} parent=0
    _
  %s14 = ssub.s32 1, %s12
  %s15 = scalar_select 0, %s14, %s12
  loop: start=0, step=1, limit=4
  $region2: #{tpu_custom_call.1} parent=0 // loop_pre_header
    _
  $region3: #{tpu_custom_call.1} parent=0 // loop_header
    %s17 = sphi 0, %s21
    %p18 = scmp.ge.s32.totalorder %s17, 4
    %s24 = sphi 0, %s36
    %s25 = sphi 0, %s32
    %s26 = sphi 0, %s24
    %s27 = sphi 0, %s25
    %s28 = sphi 0, %s26
    %s29 = sphi 0, %s27
    %s41 = sphi 0, %s43
    %s44 = sphi 0, %s41
    %s45 = sphi 0, %s44
    %s61 = sphi 0, %s45
    %s65 = sphi 0, %s65
    %s67 = sphi 0, %s65
    %s68 = sphi 0, %s67
    %s82 = sphi 0, %s68
    %s86 = sphi 0, %s86
    %s88 = sphi 0, %s86
    %s89 = sphi 0, %s88
    %s103 = sphi 0, %s89
    %s107 = sphi 0, %s107
    %s109 = sphi 0, %s107
    %s110 = sphi 0, %s109
    %s124 = sphi 0, %s110
    %s128 = sphi 0, %s128
    %s130 = sphi 0, %s128
    %s131 = sphi 0, %s130
    %s145 = sphi 0, %s131
    %s149 = sphi 0, %s149
    %s151 = sphi 0, %s149
    %s152 = sphi 0, %s151
    %s166 = sphi 0, %s152
    %s170 = sphi 0, %s170
    %s172 = sphi 0, %s170
    %s173 = sphi 0, %s172
    %s187 = sphi 0, %s173
    %s193 = sphi 0, %s195
    %s196 = sphi 0, %s193
    %s197 = sphi 0, %s196
    %s213 = sphi 0, %s197
    %s217 = sphi 0, %s217
    %s219 = sphi 0, %s217
    %s220 = sphi 0, %s219
    %s234 = sphi 0, %s220
    %s238 = sphi 0, %s238
    %s240 = sphi 0, %s238
    %s241 = sphi 0, %s240
    %s255 = sphi 0, %s241
    %s259 = sphi 0, %s259
    %s261 = sphi 0, %s259
    %s262 = sphi 0, %s261
    %s276 = sphi 0, %s262
    %s284 = sphi 0, %s286
    %s287 = sphi 0, %s284
    %s288 = sphi 0, %s287
    %s304 = sphi 0, %s288
  $region4: #{tpu_custom_call.1} parent=0 // loop_header_branch
    %20 = sbr.rel (%p18) target = $region8
  $region5: #{tpu_custom_call.1} parent=0 // loop_body
    %s22 = ssub.s32 %s17, 1
    %s23 = ssub.s32 %s17, 2
    %s30 = sadd.s32 1, %s25
    %p31 = scmp.ge.s32.totalorder %s30, 1
    %s32 = scalar_select %p31, 0, %s30
    %s33 = sadd.s32 1, %s24
    %s34 = scalar_select %p31, %s33, %s24
    %p35 = scmp.ge.s32.totalorder %s34, 2
    %s36 = scalar_select %p35, 0, %s34
    %s37 = ssub.s32 %s24, %s36
    %s38 = ssub.s32 %s25, %s32
    %s39 = sor.u32 %s37, %s38
    %p40 = scmp.eq.s32.totalorder %s39, 0
    %s42 = sadd.s32 %s41, 1
    %s43 = scalar_select %p40, %s41, %s42
    %p46 = pneg %p40
    %p47 = scmp.eq.s32.totalorder %s17, 1
    %p48 = por %p46, %p47
    %p49 = scmp.ne.s32.totalorder %s41, %s44
    %p50 = scmp.eq.s32.totalorder %s17, 0
    %p51 = por %p49, %p50
    %p52 = scmp.ne.s32.totalorder %s41, %s44
    %p53 = scmp.eq.s32.totalorder %s22, 1
    %p54 = por %p52, %p53
    %p55 = scmp.ne.s32.totalorder %s44, %s45
    %p56 = scmp.eq.s32.totalorder %s22, 0
    %p57 = por %p55, %p56
    %p58 = scmp.ne.s32.totalorder %s44, %s45
    %p59 = scmp.eq.s32.totalorder %s23, 1
    %p60 = por %p58, %p59
    %p62 = scmp.ne.s32.totalorder %s45, %s61
    %p63 = scmp.eq.s32.totalorder %s23, 0
    %p64 = por %p62, %p63
    %s66 = sadd.s32 %s65, 1
    %p69 = scmp.eq.s32.totalorder %s17, 1
    %p70 = scmp.ne.s32.totalorder %s65, %s67
    %p71 = scmp.eq.s32.totalorder %s17, 0
    %p72 = por %p70, %p71
    %p73 = scmp.ne.s32.totalorder %s65, %s67
    %p74 = scmp.eq.s32.totalorder %s22, 1
    %p75 = por %p73, %p74
    %p76 = scmp.ne.s32.totalorder %s67, %s68
    %p77 = scmp.eq.s32.totalorder %s22, 0
    %p78 = por %p76, %p77
    %p79 = scmp.ne.s32.totalorder %s67, %s68
    %p80 = scmp.eq.s32.totalorder %s23, 1
    %p81 = por %p79, %p80
    %p83 = scmp.ne.s32.totalorder %s68, %s82
    %p84 = scmp.eq.s32.totalorder %s23, 0
    %p85 = por %p83, %p84
    %s87 = sadd.s32 %s86, 1
    %p90 = scmp.eq.s32.totalorder %s17, 1
    %p91 = scmp.ne.s32.totalorder %s86, %s88
    %p92 = scmp.eq.s32.totalorder %s17, 0
    %p93 = por %p91, %p92
    %p94 = scmp.ne.s32.totalorder %s86, %s88
    %p95 = scmp.eq.s32.totalorder %s22, 1
    %p96 = por %p94, %p95
    %p97 = scmp.ne.s32.totalorder %s88, %s89
    %p98 = scmp.eq.s32.totalorder %s22, 0
    %p99 = por %p97, %p98
    %p100 = scmp.ne.s32.totalorder %s88, %s89
    %p101 = scmp.eq.s32.totalorder %s23, 1
    %p102 = por %p100, %p101
    %p104 = scmp.ne.s32.totalorder %s89, %s103
    %p105 = scmp.eq.s32.totalorder %s23, 0
    %p106 = por %p104, %p105
    %s108 = sadd.s32 %s107, 1
    %p111 = scmp.eq.s32.totalorder %s17, 1
    %p112 = scmp.ne.s32.totalorder %s107, %s109
    %p113 = scmp.eq.s32.totalorder %s17, 0
    %p114 = por %p112, %p113
    %p115 = scmp.ne.s32.totalorder %s107, %s109
    %p116 = scmp.eq.s32.totalorder %s22, 1
    %p117 = por %p115, %p116
    %p118 = scmp.ne.s32.totalorder %s109, %s110
    %p119 = scmp.eq.s32.totalorder %s22, 0
    %p120 = por %p118, %p119
    %p121 = scmp.ne.s32.totalorder %s109, %s110
    %p122 = scmp.eq.s32.totalorder %s23, 1
    %p123 = por %p121, %p122
    %p125 = scmp.ne.s32.totalorder %s110, %s124
    %p126 = scmp.eq.s32.totalorder %s23, 0
    %p127 = por %p125, %p126
    %s129 = sadd.s32 %s128, 1
    %p132 = scmp.eq.s32.totalorder %s17, 1
    %p133 = scmp.ne.s32.totalorder %s128, %s130
    %p134 = scmp.eq.s32.totalorder %s17, 0
    %p135 = por %p133, %p134
    %p136 = scmp.ne.s32.totalorder %s128, %s130
    %p137 = scmp.eq.s32.totalorder %s22, 1
    %p138 = por %p136, %p137
    %p139 = scmp.ne.s32.totalorder %s130, %s131
    %p140 = scmp.eq.s32.totalorder %s22, 0
    %p141 = por %p139, %p140
    %p142 = scmp.ne.s32.totalorder %s130, %s131
    %p143 = scmp.eq.s32.totalorder %s23, 1
    %p144 = por %p142, %p143
    %p146 = scmp.ne.s32.totalorder %s131, %s145
    %p147 = scmp.eq.s32.totalorder %s23, 0
    %p148 = por %p146, %p147
    %s150 = sadd.s32 %s149, 1
    %p153 = scmp.eq.s32.totalorder %s17, 1
    %p154 = scmp.ne.s32.totalorder %s149, %s151
    %p155 = scmp.eq.s32.totalorder %s17, 0
    %p156 = por %p154, %p155
    %p157 = scmp.ne.s32.totalorder %s149, %s151
    %p158 = scmp.eq.s32.totalorder %s22, 1
    %p159 = por %p157, %p158
    %p160 = scmp.ne.s32.totalorder %s151, %s152
    %p161 = scmp.eq.s32.totalorder %s22, 0
    %p162 = por %p160, %p161
    %p163 = scmp.ne.s32.totalorder %s151, %s152
    %p164 = scmp.eq.s32.totalorder %s23, 1
    %p165 = por %p163, %p164
    %p167 = scmp.ne.s32.totalorder %s152, %s166
    %p168 = scmp.eq.s32.totalorder %s23, 0
    %p169 = por %p167, %p168
    %s171 = sadd.s32 %s170, 1
    %p174 = scmp.eq.s32.totalorder %s17, 1
    %p175 = scmp.ne.s32.totalorder %s170, %s172
    %p176 = scmp.eq.s32.totalorder %s17, 0
    %p177 = por %p175, %p176
    %p178 = scmp.ne.s32.totalorder %s170, %s172
    %p179 = scmp.eq.s32.totalorder %s22, 1
    %p180 = por %p178, %p179
    %p181 = scmp.ne.s32.totalorder %s172, %s173
    %p182 = scmp.eq.s32.totalorder %s22, 0
    %p183 = por %p181, %p182
    %p184 = scmp.ne.s32.totalorder %s172, %s173
    %p185 = scmp.eq.s32.totalorder %s23, 1
    %p186 = por %p184, %p185
    %p188 = scmp.ne.s32.totalorder %s173, %s187
    %p189 = scmp.eq.s32.totalorder %s23, 0
    %p190 = por %p188, %p189
    %s191 = ssub.s32 %s25, %s32
    %p192 = scmp.eq.s32.totalorder %s191, 0
    %s194 = sadd.s32 %s193, 1
    %s195 = scalar_select %p192, %s193, %s194
    %p198 = pneg %p192
    %p199 = scmp.eq.s32.totalorder %s17, 1
    %p200 = por %p198, %p199
    %p201 = scmp.ne.s32.totalorder %s193, %s196
    %p202 = scmp.eq.s32.totalorder %s17, 0
    %p203 = por %p201, %p202
    %p204 = scmp.ne.s32.totalorder %s193, %s196
    %p205 = scmp.eq.s32.totalorder %s22, 1
    %p206 = por %p204, %p205
    %p207 = scmp.ne.s32.totalorder %s196, %s197
    %p208 = scmp.eq.s32.totalorder %s22, 0
    %p209 = por %p207, %p208
    %p210 = scmp.ne.s32.totalorder %s196, %s197
    %p211 = scmp.eq.s32.totalorder %s23, 1
    %p212 = por %p210, %p211
    %p214 = scmp.ne.s32.totalorder %s197, %s213
    %p215 = scmp.eq.s32.totalorder %s23, 0
    %p216 = por %p214, %p215
    %s218 = sadd.s32 %s217, 1
    %p221 = scmp.eq.s32.totalorder %s17, 1
    %p222 = scmp.ne.s32.totalorder %s217, %s219
    %p223 = scmp.eq.s32.totalorder %s17, 0
    %p224 = por %p222, %p223
    %p225 = scmp.ne.s32.totalorder %s217, %s219
    %p226 = scmp.eq.s32.totalorder %s22, 1
    %p227 = por %p225, %p226
    %p228 = scmp.ne.s32.totalorder %s219, %s220
    %p229 = scmp.eq.s32.totalorder %s22, 0
    %p230 = por %p228, %p229
    %p231 = scmp.ne.s32.totalorder %s219, %s220
    %p232 = scmp.eq.s32.totalorder %s23, 1
    %p233 = por %p231, %p232
    %p235 = scmp.ne.s32.totalorder %s220, %s234
    %p236 = scmp.eq.s32.totalorder %s23, 0
    %p237 = por %p235, %p236
    %s239 = sadd.s32 %s238, 1
    %p242 = scmp.eq.s32.totalorder %s17, 1
    %p243 = scmp.ne.s32.totalorder %s238, %s240
    %p244 = scmp.eq.s32.totalorder %s17, 0
    %p245 = por %p243, %p244
    %p246 = scmp.ne.s32.totalorder %s238, %s240
    %p247 = scmp.eq.s32.totalorder %s22, 1
    %p248 = por %p246, %p247
    %p249 = scmp.ne.s32.totalorder %s240, %s241
    %p250 = scmp.eq.s32.totalorder %s22, 0
    %p251 = por %p249, %p250
    %p252 = scmp.ne.s32.totalorder %s240, %s241
    %p253 = scmp.eq.s32.totalorder %s23, 1
    %p254 = por %p252, %p253
    %p256 = scmp.ne.s32.totalorder %s241, %s255
    %p257 = scmp.eq.s32.totalorder %s23, 0
    %p258 = por %p256, %p257
    %s260 = sadd.s32 %s259, 1
    %p263 = scmp.eq.s32.totalorder %s17, 1
    %p264 = scmp.ne.s32.totalorder %s259, %s261
    %p265 = scmp.eq.s32.totalorder %s17, 0
    %p266 = por %p264, %p265
    %p267 = scmp.ne.s32.totalorder %s259, %s261
    %p268 = scmp.eq.s32.totalorder %s22, 1
    %p269 = por %p267, %p268
    %p270 = scmp.ne.s32.totalorder %s261, %s262
    %p271 = scmp.eq.s32.totalorder %s22, 0
    %p272 = por %p270, %p271
    %p273 = scmp.ne.s32.totalorder %s261, %s262
    %p274 = scmp.eq.s32.totalorder %s23, 1
    %p275 = por %p273, %p274
    %p277 = scmp.ne.s32.totalorder %s262, %s276
    %p278 = scmp.eq.s32.totalorder %s23, 0
    %p279 = por %p277, %p278
    %s280 = ssub.s32 %s24, %s36
    %s281 = ssub.s32 %s25, %s32
    %s282 = sor.u32 %s280, %s281
    %p283 = scmp.eq.s32.totalorder %s282, 0
    %s285 = sadd.s32 %s284, 1
    %s286 = scalar_select %p283, %s284, %s285
    %p289 = pneg %p283
    %p290 = scmp.eq.s32.totalorder %s17, 1
    %p291 = por %p289, %p290
    %p292 = scmp.ne.s32.totalorder %s284, %s287
    %p293 = scmp.eq.s32.totalorder %s17, 0
    %p294 = por %p292, %p293
    %p295 = scmp.ne.s32.totalorder %s284, %s287
    %p296 = scmp.eq.s32.totalorder %s22, 1
    %p297 = por %p295, %p296
    %p298 = scmp.ne.s32.totalorder %s287, %s288
    %p299 = scmp.eq.s32.totalorder %s22, 0
    %p300 = por %p298, %p299
    %p301 = scmp.ne.s32.totalorder %s287, %s288
    %p302 = scmp.eq.s32.totalorder %s23, 1
    %p303 = por %p301, %p302
    %p305 = scmp.ne.s32.totalorder %s288, %s304
    %p306 = scmp.eq.s32.totalorder %s23, 0
    %p307 = por %p305, %p306
    %p308 = scmp.le.s32.totalorder 1, %s17
    %p309 = scmp.lt.s32.totalorder %s17, 3
    %p310 = pnand %p308, %p309
    %p311 = pneg %p310
    // Predicated region
    $region9: #{tpu_custom_call.1} parent=5 // pred_check
      _
    $region10: #{tpu_custom_call.1} parent=5 // pred_check_branch
      %313 = sbr.rel (%p310) target = $region12
    $region11: #{tpu_custom_call.1} parent=5 // pred_region
      %s314 = ssub.s32 %s17, 1
      // Predicated region
      $region13: #{tpu_custom_call.1} parent=11 // pred_check
        %p315 = pneg %p78
      $region14: #{tpu_custom_call.1} parent=11 // pred_check_branch
        %317 = sbr.rel (%p315) target = $region16
      $region15: #{tpu_custom_call.1} parent=11 // pred_region
        _
      $region16: #{tpu_custom_call.1} parent=11 // pred_fallthru
        _
      // Predicated region
      $region17: #{tpu_custom_call.1} parent=11 // pred_check
        %p318 = pneg %p99
      $region18: #{tpu_custom_call.1} parent=11 // pred_check_branch
        %320 = sbr.rel (%p318) target = $region20
      $region19: #{tpu_custom_call.1} parent=11 // pred_region
        _
      $region20: #{tpu_custom_call.1} parent=11 // pred_fallthru
        _
      // Predicated region
      $region21: #{tpu_custom_call.1} parent=11 // pred_check
        %p321 = pneg %p120
      $region22: #{tpu_custom_call.1} parent=11 // pred_check_branch
        %323 = sbr.rel (%p321) target = $region24
      $region23: #{tpu_custom_call.1} parent=11 // pred_region
        _
      $region24: #{tpu_custom_call.1} parent=11 // pred_fallthru
        _
      // Predicated region
      $region25: #{tpu_custom_call.1} parent=11 // pred_check
        %p324 = pneg %p141
      $region26: #{tpu_custom_call.1} parent=11 // pred_check_branch
        %326 = sbr.rel (%p324) target = $region28
      $region27: #{tpu_custom_call.1} parent=11 // pred_region
        _
      $region28: #{tpu_custom_call.1} parent=11 // pred_fallthru
        _
      // Predicated region
      $region29: #{tpu_custom_call.1} parent=11 // pred_check
        %p327 = pneg %p162
      $region30: #{tpu_custom_call.1} parent=11 // pred_check_branch
        %329 = sbr.rel (%p327) target = $region32
      $region31: #{tpu_custom_call.1} parent=11 // pred_region
        _
      $region32: #{tpu_custom_call.1} parent=11 // pred_fallthru
        _
      // Predicated region
      $region33: #{tpu_custom_call.1} parent=11 // pred_check
        %p330 = pneg %p183
      $region34: #{tpu_custom_call.1} parent=11 // pred_check_branch
        %332 = sbr.rel (%p330) target = $region36
      $region35: #{tpu_custom_call.1} parent=11 // pred_region
        _
      $region36: #{tpu_custom_call.1} parent=11 // pred_fallthru
        _
      // Predicated region
      $region37: #{tpu_custom_call.1} parent=11 // pred_check
        %p333 = pneg %p209
      $region38: #{tpu_custom_call.1} parent=11 // pred_check_branch
        %335 = sbr.rel (%p333) target = $region40
      $region39: #{tpu_custom_call.1} parent=11 // pred_region
        %s336 = smul.u32 2, %s27
        %p337 = scmp.lt.s32.totalorder %s336, 1
        %s338 = scalar_select %p337, %s336, 1
        %s339 = smul.addr %s338, 2
        %s340 = scalar_lea.vmem %s7, %s339
        %s341 = smul.u32 2, %s27
      $region40: #{tpu_custom_call.1} parent=11 // pred_fallthru
        _
      // Predicated region
      $region41: #{tpu_custom_call.1} parent=11 // pred_check
        %p342 = pneg %p230
      $region42: #{tpu_custom_call.1} parent=11 // pred_check_branch
        %344 = sbr.rel (%p342) target = $region44
      $region43: #{tpu_custom_call.1} parent=11 // pred_region
        _
      $region44: #{tpu_custom_call.1} parent=11 // pred_fallthru
        _
      // Predicated region
      $region45: #{tpu_custom_call.1} parent=11 // pred_check
        %p345 = pneg %p251
      $region46: #{tpu_custom_call.1} parent=11 // pred_check_branch
        %347 = sbr.rel (%p345) target = $region48
      $region47: #{tpu_custom_call.1} parent=11 // pred_region
        _
      $region48: #{tpu_custom_call.1} parent=11 // pred_fallthru
        _
      // Predicated region
      $region49: #{tpu_custom_call.1} parent=11 // pred_check
        %p348 = pneg %p272
      $region50: #{tpu_custom_call.1} parent=11 // pred_check_branch
        %350 = sbr.rel (%p348) target = $region52
      $region51: #{tpu_custom_call.1} parent=11 // pred_region
        _
      $region52: #{tpu_custom_call.1} parent=11 // pred_fallthru
        _
    $region12: #{tpu_custom_call.1} parent=5 // pred_fallthru
      _
    %p351 = scmp.lt.s32.totalorder %s17, 2
    // Predicated region
    $region53: #{tpu_custom_call.1} parent=5 // pred_check
      %p352 = pneg %p351
    $region54: #{tpu_custom_call.1} parent=5 // pred_check_branch
      %354 = sbr.rel (%p352) target = $region56
    $region55: #{tpu_custom_call.1} parent=5 // pred_region
      // Predicated region
      $region57: #{tpu_custom_call.1} parent=55 // pred_check
        %p355 = pneg %p51
      $region58: #{tpu_custom_call.1} parent=55 // pred_check_branch
        %357 = sbr.rel (%p355) target = $region60
      $region59: #{tpu_custom_call.1} parent=55 // pred_region
        %s358 = smul.u32 2, %s25
        %p359 = scmp.lt.s32.totalorder %s24, 1
        %s360 = scalar_select %p359, %s24, 1
        %p361 = scmp.lt.s32.totalorder %s358, 1
        %s362 = scalar_select %p361, %s358, 1
        %s363 = smul.addr %s360, 4
        %s364 = sadd.s32 %s362, %s363
        %s365 = smul.addr %s364, 8
        %s366 = scalar_lea.vmem %s0, %s365
        %s367 = smul.u32 2, %s25
      $region60: #{tpu_custom_call.1} parent=55 // pred_fallthru
        _
    $region56: #{tpu_custom_call.1} parent=5 // pred_fallthru
      _
    %p368 = scmp.le.s32.totalorder 1, %s17
    %p369 = scmp.lt.s32.totalorder %s17, 3
    %p370 = pnand %p368, %p369
    %p371 = pneg %p370
    // Predicated region
    $region61: #{tpu_custom_call.1} parent=5 // pred_check
      _
    $region62: #{tpu_custom_call.1} parent=5 // pred_check_branch
      %373 = sbr.rel (%p370) target = $region64
    $region63: #{tpu_custom_call.1} parent=5 // pred_region
      %s374 = ssub.s32 %s17, 1
      %s375 = smul.u32 2, %s27
      %p376 = scmp.lt.s32.totalorder %s26, 1
      %s377 = scalar_select %p376, %s26, 1
      %p378 = scmp.lt.s32.totalorder %s375, 1
      %s379 = scalar_select %p378, %s375, 1
      %s380 = smul.addr %s377, 4
      %s381 = sadd.s32 %s379, %s380
      %s382 = smul.addr %s381, 8
      %s383 = scalar_lea.vmem %s0, %s382
      %p384 = pneg %p57
      %p385 = pneg %p54
      %p386 = pneg %p78
      %p387 = pneg %p75
      %p388 = pneg %p99
      %p389 = pneg %p96
      %p390 = pneg %p120
      %p391 = pneg %p117
      %p392 = pneg %p141
      %p393 = pneg %p138
      %p394 = pneg %p162
      %p395 = pneg %p159
      %p396 = pneg %p183
      %p397 = pneg %p180
      %s398 = smul.u32 2, %s27
      %p399 = scmp.lt.s32.totalorder %s398, 1
      %s400 = scalar_select %p399, %s398, 1
      %s401 = smul.addr %s400, 2
      %s402 = scalar_lea.vmem %s7, %s401
      %p403 = pneg %p209
      %p404 = pneg %p206
      %p405 = pneg %p230
      %p406 = pneg %p227
      %p407 = pneg %p251
      %p408 = pneg %p248
      %p409 = pneg %p272
      %p410 = pneg %p269
      %p411 = pneg %p300
      %p412 = pneg %p297
      %s413 = smul.u32 2, %s27
      %p414 = scmp.lt.s32.totalorder %s26, 1
      %s415 = scalar_select %p414, %s26, 1
      %p416 = scmp.lt.s32.totalorder %s413, 1
      %s417 = scalar_select %p416, %s413, 1
      %s418 = smul.addr %s415, 8
      %s419 = sadd.s32 %s417, %s418
      %s420 = smul.addr %s419, 8
      %s421 = scalar_lea.vmem %s11, %s420
      %s422 = smul.u32 2, %s27
      %p423 = scmp.lt.s32.totalorder %s26, 1
      %s424 = scalar_select %p423, %s26, 1
      %p425 = scmp.lt.s32.totalorder %s422, 1
      %s426 = scalar_select %p425, %s422, 1
      %s427 = smul.addr %s424, 4
      %s428 = sadd.s32 %s426, %s427
      %s429 = smul.addr %s428, 8
      %s430 = scalar_lea.vmem %s0, %s429
      %s431 = smul.u32 2, %s27
      %s432 = smul.u32 2, %s27
      %p433 = scmp.lt.s32.totalorder %s432, 1
      %s434 = scalar_select %p433, %s432, 1
      %s435 = smul.addr %s434, 2
      %s436 = scalar_lea.vmem %s7, %s435
      %s437 = smul.u32 2, %s27
      %s438 = smul.u32 2, %s27
      %p439 = scmp.lt.s32.totalorder %s26, 1
      %s440 = scalar_select %p439, %s26, 1
      %p441 = scmp.lt.s32.totalorder %s438, 1
      %s442 = scalar_select %p441, %s438, 1
      %s443 = smul.addr %s440, 8
      %s444 = sadd.s32 %s442, %s443
      %s445 = smul.addr %s444, 8
      %s446 = scalar_lea.vmem %s11, %s445
      %s447 = smul.u32 2, %s27
      %v448 = vld [vmem:[%s430] sm:$0xff]
      %v449 = vld [vmem:[%s430 + $0x8] sm:$0xff]
      %v450 = vld [vmem:[%s430 + $0x10] sm:$0xff]
      %v451 = vld [vmem:[%s430 + $0x18] sm:$0xff]
      %v452 = vld [vmem:[%s1] sm:$0xff]
      %v453 = vld [vmem:[%s1 + $0x8] sm:$0xff]
      %v454 = vld [vmem:[%s1 + $0x10] sm:$0xff]
      %v455 = vld [vmem:[%s1 + $0x18] sm:$0x7]
      %v456 = vld [vmem:[%s2] sm:$0xff]
      %v457 = vld [vmem:[%s2 + $0x8] sm:$0xff]
      %v458 = vld [vmem:[%s2 + $0x10] sm:$0xff]
      %v459 = vld [vmem:[%s2 + $0x18] sm:$0x7]
      %461 = vset.pattern.permute.xlu0 0
      %462 = vperm.xlu0 %461, %v456
      %v463 = vpop.permute.xlu0 %462
      %466 = vset.pattern.permute.xlu0 0
      %467 = vperm.xlu0 %466, %v457
      %v468 = vpop.permute.xlu0 %467
      %471 = vset.pattern.permute.xlu0 0
      %472 = vperm.xlu0 %471, %v458
      %v473 = vpop.permute.xlu0 %472
      %476 = vset.pattern.permute.xlu0 0
      %477 = vperm.xlu0 %476, %v459
      %v478 = vpop.permute.xlu0 %477
      %vm480 = vcmask 130048
      %v482 = vsel %vm480, %v452, 0
      %v485 = vsel %vm480, %v453, 0
      %v488 = vsel %vm480, %v454, 0
      %v491 = vsel %vm480, %v455, 0
      %493 = vmatpush.msra.mxu0 0.0
      %494 = vmatpush.msra.mxu0 0.0
      %495 = vmatpush.msra.mxu0 0.0
      %496 = vmatpush.msra.mxu0 0.0
      %497 = vmatpush.msra.mxu0 0.0
      %498 = vmatpush.msra.mxu0 0.0
      %499 = vmatpush.msra.mxu0 0.0
      %500 = vmatpush.msra.mxu0 0.0
      %501 = vmatpush.msra.mxu0 0.0
      %502 = vmatpush.msra.mxu0 0.0
      %503 = vmatpush.msra.mxu0 0.0
      %504 = vmatpush.msra.mxu0 0.0
      %505 = vmatpush.msra.mxu0 0.0
      %506 = vmatpush.msra.mxu0 0.0
      %507 = vmatpush.msra.mxu0 %v450
      %508 = vmatpush.msra.mxu0 %v448
      %509 = vmatmul.f32.gmra.mxu0 %v482
      %v510 = vpop.f32.mrf.mxu0
      %v511 = vadd.f32 %v463, %v510
      %512 = vmatmul.f32.gmra.mxu0 %v485
      %v513 = vpop.f32.mrf.mxu0
      %v514 = vadd.f32 %v468, %v513
      %515 = vmatmul.f32.gmra.mxu0 %v488
      %v516 = vpop.f32.mrf.mxu0
      %v517 = vadd.f32 %v473, %v516
      %518 = vmatmul.f32.gmra.mxu0 %v491
      %v519 = vpop.f32.mrf.mxu0
      %v520 = vadd.f32 %v478, %v519
      %521 = vdwg.mxu0
      %522 = vmatpush.msra.mxu0 0.0
      %523 = vmatpush.msra.mxu0 0.0
      %524 = vmatpush.msra.mxu0 0.0
      %525 = vmatpush.msra.mxu0 0.0
      %526 = vmatpush.msra.mxu0 0.0
      %527 = vmatpush.msra.mxu0 0.0
      %528 = vmatpush.msra.mxu0 0.0
      %529 = vmatpush.msra.mxu0 0.0
      %530 = vmatpush.msra.mxu0 0.0
      %531 = vmatpush.msra.mxu0 0.0
      %532 = vmatpush.msra.mxu0 0.0
      %533 = vmatpush.msra.mxu0 0.0
      %534 = vmatpush.msra.mxu0 0.0
      %535 = vmatpush.msra.mxu0 0.0
      %536 = vmatpush.msra.mxu0 %v451
      %537 = vmatpush.msra.mxu0 %v449
      %538 = vmatmul.f32.gmra.mxu0 %v482
      %v539 = vpop.f32.mrf.mxu0
      %v540 = vadd.f32 %v463, %v539
      %541 = vmatmul.f32.gmra.mxu0 %v485
      %v542 = vpop.f32.mrf.mxu0
      %v543 = vadd.f32 %v468, %v542
      %544 = vmatmul.f32.gmra.mxu0 %v488
      %v545 = vpop.f32.mrf.mxu0
      %v546 = vadd.f32 %v473, %v545
      %547 = vmatmul.f32.gmra.mxu0 %v491
      %v548 = vpop.f32.mrf.mxu0
      %v549 = vadd.f32 %v478, %v548
      %550 = vdwg.mxu0
      %v551 = vxor.u32 %v511, 2147483648
      %v552 = vxor.u32 %v540, 2147483648
      %v553 = vxor.u32 %v514, 2147483648
      %v554 = vxor.u32 %v543, 2147483648
      %v555 = vxor.u32 %v517, 2147483648
      %v556 = vxor.u32 %v546, 2147483648
      %v557 = vxor.u32 %v520, 2147483648
      %v558 = vxor.u32 %v549, 2147483648
      %v559 = vmul.f32 %v551, 1.442695
      %v560 = vpow.pop %v559
      %v561 = vmul.f32 %v552, 1.442695
      %v562 = vpow.pop %v561
      %v563 = vmul.f32 %v553, 1.442695
      %v564 = vpow.pop %v563
      %v565 = vmul.f32 %v554, 1.442695
      %v566 = vpow.pop %v565
      %v567 = vmul.f32 %v555, 1.442695
      %v568 = vpow.pop %v567
      %v569 = vmul.f32 %v556, 1.442695
      %v570 = vpow.pop %v569
      %v571 = vmul.f32 %v557, 1.442695
      %v572 = vpow.pop %v571
      %v573 = vmul.f32 %v558, 1.442695
      %v574 = vpow.pop %v573
      %v575 = vadd.f32 %v560, 1.0
      %v576 = vadd.f32 %v562, 1.0
      %v577 = vadd.f32 %v564, 1.0
      %v578 = vadd.f32 %v566, 1.0
      %v579 = vadd.f32 %v568, 1.0
      %v580 = vadd.f32 %v570, 1.0
      %v581 = vadd.f32 %v572, 1.0
      %v582 = vadd.f32 %v574, 1.0
      %v583 = vrcp.pop %v575
      %v584 = vmul.f32 %v575, %v583
      %v585 = vsub.f32 1.0, %v584
      %v586 = vmul.f32 %v583, %v585
      %v587 = vadd.f32 %v583, %v586
      %vm588 = vweird.f32 %v575
      %vm589 = vweird.f32 %v583
      %vm590 = vmor %vm588, %vm589
      %v591 = vsel %vm590, %v583, %v587
      %v592 = vand.u32 2147483647, %v575
      %vm593 = vcmp.eq.f32.partialorder %v592, 8.507059e+37
      %v594 = vand.u32 %v575, 2147483648
      %v595 = vor.u32 1.1754944e-38, %v594
      %v596 = vsel %vm593, %v595, %v591
      %v597 = vmul.f32 1.0, %v596
      %v598 = vrcp.pop %v576
      %v599 = vmul.f32 %v576, %v598
      %v600 = vsub.f32 1.0, %v599
      %v601 = vmul.f32 %v598, %v600
      %v602 = vadd.f32 %v598, %v601
      %vm603 = vweird.f32 %v576
      %vm604 = vweird.f32 %v598
      %vm605 = vmor %vm603, %vm604
      %v606 = vsel %vm605, %v598, %v602
      %v607 = vand.u32 2147483647, %v576
      %vm608 = vcmp.eq.f32.partialorder %v607, 8.507059e+37
      %v609 = vand.u32 %v576, 2147483648
      %v610 = vor.u32 1.1754944e-38, %v609
      %v611 = vsel %vm608, %v610, %v606
      %v612 = vmul.f32 1.0, %v611
      %v613 = vrcp.pop %v577
      %v614 = vmul.f32 %v577, %v613
      %v615 = vsub.f32 1.0, %v614
      %v616 = vmul.f32 %v613, %v615
      %v617 = vadd.f32 %v613, %v616
      %vm618 = vweird.f32 %v577
      %vm619 = vweird.f32 %v613
      %vm620 = vmor %vm618, %vm619
      %v621 = vsel %vm620, %v613, %v617
      %v622 = vand.u32 2147483647, %v577
      %vm623 = vcmp.eq.f32.partialorder %v622, 8.507059e+37
      %v624 = vand.u32 %v577, 2147483648
      %v625 = vor.u32 1.1754944e-38, %v624
      %v626 = vsel %vm623, %v625, %v621
      %v627 = vmul.f32 1.0, %v626
      %v628 = vrcp.pop %v578
      %v629 = vmul.f32 %v578, %v628
      %v630 = vsub.f32 1.0, %v629
      %v631 = vmul.f32 %v628, %v630
      %v632 = vadd.f32 %v628, %v631
      %vm633 = vweird.f32 %v578
      %vm634 = vweird.f32 %v628
      %vm635 = vmor %vm633, %vm634
      %v636 = vsel %vm635, %v628, %v632
      %v637 = vand.u32 2147483647, %v578
      %vm638 = vcmp.eq.f32.partialorder %v637, 8.507059e+37
      %v639 = vand.u32 %v578, 2147483648
      %v640 = vor.u32 1.1754944e-38, %v639
      %v641 = vsel %vm638, %v640, %v636
      %v642 = vmul.f32 1.0, %v641
      %v643 = vrcp.pop %v579
      %v644 = vmul.f32 %v579, %v643
      %v645 = vsub.f32 1.0, %v644
      %v646 = vmul.f32 %v643, %v645
      %v647 = vadd.f32 %v643, %v646
      %vm648 = vweird.f32 %v579
      %vm649 = vweird.f32 %v643
      %vm650 = vmor %vm648, %vm649
      %v651 = vsel %vm650, %v643, %v647
      %v652 = vand.u32 2147483647, %v579
      %vm653 = vcmp.eq.f32.partialorder %v652, 8.507059e+37
      %v654 = vand.u32 %v579, 2147483648
      %v655 = vor.u32 1.1754944e-38, %v654
      %v656 = vsel %vm653, %v655, %v651
      %v657 = vmul.f32 1.0, %v656
      %v658 = vrcp.pop %v580
      %v659 = vmul.f32 %v580, %v658
      %v660 = vsub.f32 1.0, %v659
      %v661 = vmul.f32 %v658, %v660
      %v662 = vadd.f32 %v658, %v661
      %vm663 = vweird.f32 %v580
      %vm664 = vweird.f32 %v658
      %vm665 = vmor %vm663, %vm664
      %v666 = vsel %vm665, %v658, %v662
      %v667 = vand.u32 2147483647, %v580
      %vm668 = vcmp.eq.f32.partialorder %v667, 8.507059e+37
      %v669 = vand.u32 %v580, 2147483648
      %v670 = vor.u32 1.1754944e-38, %v669
      %v671 = vsel %vm668, %v670, %v666
      %v672 = vmul.f32 1.0, %v671
      %v673 = vrcp.pop %v581
      %v674 = vmul.f32 %v581, %v673
      %v675 = vsub.f32 1.0, %v674
      %v676 = vmul.f32 %v673, %v675
      %v677 = vadd.f32 %v673, %v676
      %vm678 = vweird.f32 %v581
      %vm679 = vweird.f32 %v673
      %vm680 = vmor %vm678, %vm679
      %v681 = vsel %vm680, %v673, %v677
      %v682 = vand.u32 2147483647, %v581
      %vm683 = vcmp.eq.f32.partialorder %v682, 8.507059e+37
      %v684 = vand.u32 %v581, 2147483648
      %v685 = vor.u32 1.1754944e-38, %v684
      %v686 = vsel %vm683, %v685, %v681
      %v687 = vmul.f32 1.0, %v686
      %v688 = vrcp.pop %v582
      %v689 = vmul.f32 %v582, %v688
      %v690 = vsub.f32 1.0, %v689
      %v691 = vmul.f32 %v688, %v690
      %v692 = vadd.f32 %v688, %v691
      %vm693 = vweird.f32 %v582
      %vm694 = vweird.f32 %v688
      %vm695 = vmor %vm693, %vm694
      %v696 = vsel %vm695, %v688, %v692
      %v697 = vand.u32 2147483647, %v582
      %vm698 = vcmp.eq.f32.partialorder %v697, 8.507059e+37
      %v699 = vand.u32 %v582, 2147483648
      %v700 = vor.u32 1.1754944e-38, %v699
      %v701 = vsel %vm698, %v700, %v696
      %v702 = vmul.f32 1.0, %v701
      %v703 = vld [vmem:[%s8] sm:$0xff]
      %v704 = vld [vmem:[%s8 + $0x8] sm:$0xff]
      %v705 = vld [vmem:[%s8 + $0x10] sm:$0xff]
      %v706 = vld [vmem:[%s8 + $0x18] sm:$0x7]
      %v707 = vld [vmem:[%s9] sm:$0xff]
      %v708 = vld [vmem:[%s9 + $0x8] sm:$0xff]
      %v709 = vld [vmem:[%s9 + $0x10] sm:$0xff]
      %v710 = vld [vmem:[%s9 + $0x18] sm:$0x7]
      %v711 = vld [vmem:[%s10] sm:$0xff]
      %v712 = vld [vmem:[%s10 + $0x8] sm:$0xff]
      %v713 = vld [vmem:[%s10 + $0x10] sm:$0xff]
      %v714 = vld [vmem:[%s10 + $0x18] sm:$0x7]
      %v715 = vadd.f32 %v703, %v707
      %v716 = vadd.f32 %v704, %v708
      %v717 = vadd.f32 %v705, %v709
      %v718 = vadd.f32 %v706, %v710
      %v719 = vadd.f32 %v715, %v711
      %v720 = vadd.f32 %v716, %v712
      %v721 = vadd.f32 %v717, %v713
      %v722 = vadd.f32 %v718, %v714
      %vm723 = vcmp.gt.f32.partialorder %v703, 0.0
      %vm724 = vcmp.gt.f32.partialorder %v704, 0.0
      %vm725 = vcmp.gt.f32.partialorder %v705, 0.0
      %vm726 = vcmp.gt.f32.partialorder %v706, 0.0
      %v727 = vsel %vm723, 1, 0
      %v728 = vsel %vm724, 1, 0
      %v729 = vsel %vm725, 1, 0
      %v730 = vsel %vm726, 1, 0
      %731 = vset.pattern.permute.xlu0 0
      %732 = vperm.xlu0 %731, %v727
      %v733 = vpop.permute.xlu0 %732
      %734 = vset.pattern.permute.xlu0 0
      %735 = vperm.xlu0 %734, %v728
      %v736 = vpop.permute.xlu0 %735
      %737 = vset.pattern.permute.xlu0 0
      %738 = vperm.xlu0 %737, %v729
      %v739 = vpop.permute.xlu0 %738
      %740 = vset.pattern.permute.xlu0 0
      %741 = vperm.xlu0 %740, %v730
      %v742 = vpop.permute.xlu0 %741
      %vm743 = vcmp.eq.s32.totalorder %v733, 1
      %vm744 = vcmp.eq.s32.totalorder %v736, 1
      %vm745 = vcmp.eq.s32.totalorder %v739, 1
      %vm746 = vcmp.eq.s32.totalorder %v742, 1
      %v747 = vsel %vm743, %v511, -inf
      %v748 = vsel %vm743, %v540, -inf
      %v749 = vsel %vm744, %v514, -inf
      %v750 = vsel %vm744, %v543, -inf
      %v751 = vsel %vm745, %v517, -inf
      %v752 = vsel %vm745, %v546, -inf
      %v753 = vsel %vm746, %v520, -inf
      %v754 = vsel %vm746, %v549, -inf
      %v755 = vmax.f32 %v747, %v751
      %vm756 = vcmask 1042432
      %v757 = vsel %vm756, %v753, -inf
      %v758 = vmax.f32 %v749, %v757
      %v759 = vmax.f32 %v755, %v758
      %v760 = vrot.slane %v759, 4
      %v761 = vmax.f32 %v759, %v760
      %v762 = vrot.slane %v761, 2
      %v763 = vmax.f32 %v761, %v762
      %v764 = vrot.slane %v763, 1
      %v765 = vmax.f32 %v763, %v764
      %v766 = vmax.f32 %v748, %v752
      %v767 = vsel %vm756, %v754, -inf
      %v768 = vmax.f32 %v750, %v767
      %v769 = vmax.f32 %v766, %v768
      %v770 = vrot.slane %v769, 4
      %v771 = vmax.f32 %v769, %v770
      %v772 = vrot.slane %v771, 2
      %v773 = vmax.f32 %v771, %v772
      %v774 = vrot.slane %v773, 1
      %v775 = vmax.f32 %v773, %v774
      %777 = vset.pattern.permute.xlu0 0
      %778 = vperm.xlu0 %777, %v703
      %v779 = vpop.permute.xlu0 %778
      %782 = vset.pattern.permute.xlu0 0
      %783 = vperm.xlu0 %782, %v704
      %v784 = vpop.permute.xlu0 %783
      %787 = vset.pattern.permute.xlu0 0
      %788 = vperm.xlu0 %787, %v705
      %v789 = vpop.permute.xlu0 %788
      %792 = vset.pattern.permute.xlu0 0
      %793 = vperm.xlu0 %792, %v706
      %v794 = vpop.permute.xlu0 %793
      %v796 = vmul.f32 %v779, %v765
      %v797 = vmul.f32 %v779, %v775
      %v798 = vmul.f32 %v784, %v765
      %v799 = vmul.f32 %v784, %v775
      %v800 = vmul.f32 %v789, %v765
      %v801 = vmul.f32 %v789, %v775
      %v802 = vmul.f32 %v794, %v765
      %v803 = vmul.f32 %v794, %v775
      %vm804 = vcmp.gt.f32.partialorder %v707, 0.0
      %vm805 = vcmp.gt.f32.partialorder %v708, 0.0
      %vm806 = vcmp.gt.f32.partialorder %v709, 0.0
      %vm807 = vcmp.gt.f32.partialorder %v710, 0.0
      %v808 = vsel %vm804, 1, 0
      %v809 = vsel %vm805, 1, 0
      %v810 = vsel %vm806, 1, 0
      %v811 = vsel %vm807, 1, 0
      %812 = vset.pattern.permute.xlu0 0
      %813 = vperm.xlu0 %812, %v808
      %v814 = vpop.permute.xlu0 %813
      %815 = vset.pattern.permute.xlu0 0
      %816 = vperm.xlu0 %815, %v809
      %v817 = vpop.permute.xlu0 %816
      %818 = vset.pattern.permute.xlu0 0
      %819 = vperm.xlu0 %818, %v810
      %v820 = vpop.permute.xlu0 %819
      %821 = vset.pattern.permute.xlu0 0
      %822 = vperm.xlu0 %821, %v811
      %v823 = vpop.permute.xlu0 %822
      %vm824 = vcmp.eq.s32.totalorder %v814, 1
      %vm825 = vcmp.eq.s32.totalorder %v817, 1
      %vm826 = vcmp.eq.s32.totalorder %v820, 1
      %vm827 = vcmp.eq.s32.totalorder %v823, 1
      %v828 = vsel %vm824, %v511, -inf
      %v829 = vsel %vm824, %v540, -inf
      %v830 = vsel %vm825, %v514, -inf
      %v831 = vsel %vm825, %v543, -inf
      %v832 = vsel %vm826, %v517, -inf
      %v833 = vsel %vm826, %v546, -inf
      %v834 = vsel %vm827, %v520, -inf
      %v835 = vsel %vm827, %v549, -inf
      %v836 = vmax.f32 %v828, %v832
      %v837 = vsel %vm756, %v834, -inf
      %v838 = vmax.f32 %v830, %v837
      %v839 = vmax.f32 %v836, %v838
      %v840 = vrot.slane %v839, 4
      %v841 = vmax.f32 %v839, %v840
      %v842 = vrot.slane %v841, 2
      %v843 = vmax.f32 %v841, %v842
      %v844 = vrot.slane %v843, 1
      %v845 = vmax.f32 %v843, %v844
      %v846 = vmax.f32 %v829, %v833
      %v847 = vsel %vm756, %v835, -inf
      %v848 = vmax.f32 %v831, %v847
      %v849 = vmax.f32 %v846, %v848
      %v850 = vrot.slane %v849, 4
      %v851 = vmax.f32 %v849, %v850
      %v852 = vrot.slane %v851, 2
      %v853 = vmax.f32 %v851, %v852
      %v854 = vrot.slane %v853, 1
      %v855 = vmax.f32 %v853, %v854
      %857 = vset.pattern.permute.xlu0 0
      %858 = vperm.xlu0 %857, %v707
      %v859 = vpop.permute.xlu0 %858
      %862 = vset.pattern.permute.xlu0 0
      %863 = vperm.xlu0 %862, %v708
      %v864 = vpop.permute.xlu0 %863
      %867 = vset.pattern.permute.xlu0 0
      %868 = vperm.xlu0 %867, %v709
      %v869 = vpop.permute.xlu0 %868
      %872 = vset.pattern.permute.xlu0 0
      %873 = vperm.xlu0 %872, %v710
      %v874 = vpop.permute.xlu0 %873
      %v876 = vmul.f32 %v859, %v845
      %v877 = vmul.f32 %v859, %v855
      %v878 = vmul.f32 %v864, %v845
      %v879 = vmul.f32 %v864, %v855
      %v880 = vmul.f32 %v869, %v845
      %v881 = vmul.f32 %v869, %v855
      %v882 = vmul.f32 %v874, %v845
      %v883 = vmul.f32 %v874, %v855
      %v884 = vadd.f32 %v796, %v876
      %v885 = vadd.f32 %v797, %v877
      %v886 = vadd.f32 %v798, %v878
      %v887 = vadd.f32 %v799, %v879
      %v888 = vadd.f32 %v800, %v880
      %v889 = vadd.f32 %v801, %v881
      %v890 = vadd.f32 %v802, %v882
      %v891 = vadd.f32 %v803, %v883
      %vm892 = vcmp.gt.f32.partialorder %v711, 0.0
      %vm893 = vcmp.gt.f32.partialorder %v712, 0.0
      %vm894 = vcmp.gt.f32.partialorder %v713, 0.0
      %vm895 = vcmp.gt.f32.partialorder %v714, 0.0
      %v896 = vsel %vm892, 1, 0
      %v897 = vsel %vm893, 1, 0
      %v898 = vsel %vm894, 1, 0
      %v899 = vsel %vm895, 1, 0
      %900 = vset.pattern.permute.xlu0 0
      %901 = vperm.xlu0 %900, %v896
      %v902 = vpop.permute.xlu0 %901
      %903 = vset.pattern.permute.xlu0 0
      %904 = vperm.xlu0 %903, %v897
      %v905 = vpop.permute.xlu0 %904
      %906 = vset.pattern.permute.xlu0 0
      %907 = vperm.xlu0 %906, %v898
      %v908 = vpop.permute.xlu0 %907
      %909 = vset.pattern.permute.xlu0 0
      %910 = vperm.xlu0 %909, %v899
      %v911 = vpop.permute.xlu0 %910
      %vm912 = vcmp.eq.s32.totalorder %v902, 1
      %vm913 = vcmp.eq.s32.totalorder %v905, 1
      %vm914 = vcmp.eq.s32.totalorder %v908, 1
      %vm915 = vcmp.eq.s32.totalorder %v911, 1
      %v916 = vsel %vm912, %v511, -inf
      %v917 = vsel %vm912, %v540, -inf
      %v918 = vsel %vm913, %v514, -inf
      %v919 = vsel %vm913, %v543, -inf
      %v920 = vsel %vm914, %v517, -inf
      %v921 = vsel %vm914, %v546, -inf
      %v922 = vsel %vm915, %v520, -inf
      %v923 = vsel %vm915, %v549, -inf
      %v924 = vmax.f32 %v916, %v920
      %v925 = vsel %vm756, %v922, -inf
      %v926 = vmax.f32 %v918, %v925
      %v927 = vmax.f32 %v924, %v926
      %v928 = vrot.slane %v927, 4
      %v929 = vmax.f32 %v927, %v928
      %v930 = vrot.slane %v929, 2
      %v931 = vmax.f32 %v929, %v930
      %v932 = vrot.slane %v931, 1
      %v933 = vmax.f32 %v931, %v932
      %v934 = vmax.f32 %v917, %v921
      %v935 = vsel %vm756, %v923, -inf
      %v936 = vmax.f32 %v919, %v935
      %v937 = vmax.f32 %v934, %v936
      %v938 = vrot.slane %v937, 4
      %v939 = vmax.f32 %v937, %v938
      %v940 = vrot.slane %v939, 2
      %v941 = vmax.f32 %v939, %v940
      %v942 = vrot.slane %v941, 1
      %v943 = vmax.f32 %v941, %v942
      %945 = vset.pattern.permute.xlu0 0
      %946 = vperm.xlu0 %945, %v711
      %v947 = vpop.permute.xlu0 %946
      %950 = vset.pattern.permute.xlu0 0
      %951 = vperm.xlu0 %950, %v712
      %v952 = vpop.permute.xlu0 %951
      %955 = vset.pattern.permute.xlu0 0
      %956 = vperm.xlu0 %955, %v713
      %v957 = vpop.permute.xlu0 %956
      %960 = vset.pattern.permute.xlu0 0
      %961 = vperm.xlu0 %960, %v714
      %v962 = vpop.permute.xlu0 %961
      %v964 = vmul.f32 %v947, %v933
      %v965 = vmul.f32 %v947, %v943
      %v966 = vmul.f32 %v952, %v933
      %v967 = vmul.f32 %v952, %v943
      %v968 = vmul.f32 %v957, %v933
      %v969 = vmul.f32 %v957, %v943
      %v970 = vmul.f32 %v962, %v933
      %v971 = vmul.f32 %v962, %v943
      %v972 = vadd.f32 %v884, %v964
      %v973 = vadd.f32 %v885, %v965
      %v974 = vadd.f32 %v886, %v966
      %v975 = vadd.f32 %v887, %v967
      %v976 = vadd.f32 %v888, %v968
      %v977 = vadd.f32 %v889, %v969
      %v978 = vadd.f32 %v890, %v970
      %v979 = vadd.f32 %v891, %v971
      %v980 = vsub.f32 %v511, %v972
      %v981 = vsub.f32 %v540, %v973
      %v982 = vsub.f32 %v514, %v974
      %v983 = vsub.f32 %v543, %v975
      %v984 = vsub.f32 %v517, %v976
      %v985 = vsub.f32 %v546, %v977
      %v986 = vsub.f32 %v520, %v978
      %v987 = vsub.f32 %v549, %v979
      %v988 = vmin.f32 %v980, 80.0
      %v989 = vmin.f32 %v981, 80.0
      %v990 = vmin.f32 %v982, 80.0
      %v991 = vmin.f32 %v983, 80.0
      %v992 = vmin.f32 %v984, 80.0
      %v993 = vmin.f32 %v985, 80.0
      %v994 = vmin.f32 %v986, 80.0
      %v995 = vmin.f32 %v987, 80.0
      %v996 = vmul.f32 %v988, 1.442695
      %v997 = vpow.pop %v996
      %v998 = vmul.f32 %v989, 1.442695
      %v999 = vpow.pop %v998
      %v1000 = vmul.f32 %v990, 1.442695
      %v1001 = vpow.pop %v1000
      %v1002 = vmul.f32 %v991, 1.442695
      %v1003 = vpow.pop %v1002
      %v1004 = vmul.f32 %v992, 1.442695
      %v1005 = vpow.pop %v1004
      %v1006 = vmul.f32 %v993, 1.442695
      %v1007 = vpow.pop %v1006
      %v1008 = vmul.f32 %v994, 1.442695
      %v1009 = vpow.pop %v1008
      %v1010 = vmul.f32 %v995, 1.442695
      %v1011 = vpow.pop %v1010
      %v1012 = vld [vmem:[%s436] ss:$2 sm:$0x3]
      %s1013 = scalar_lea.vmem %s436, 1
      %v1014 = vld [vmem:[%s1013] ss:$2 sm:$0x3]
      %v1015 = vld [vmem:[%s3] sm:$0xff]
      %v1016 = vld [vmem:[%s3 + $0x8] sm:$0xff]
      %v1017 = vld [vmem:[%s3 + $0x10] sm:$0xff]
      %v1018 = vld [vmem:[%s3 + $0x18] sm:$0x7]
      %1020 = vset.pattern.permute.xlu0 0
      %1021 = vperm.xlu0 %1020, %v1015
      %v1022 = vpop.permute.xlu0 %1021
      %1025 = vset.pattern.permute.xlu0 0
      %1026 = vperm.xlu0 %1025, %v1016
      %v1027 = vpop.permute.xlu0 %1026
      %1030 = vset.pattern.permute.xlu0 0
      %1031 = vperm.xlu0 %1030, %v1017
      %v1032 = vpop.permute.xlu0 %1031
      %1035 = vset.pattern.permute.xlu0 0
      %1036 = vperm.xlu0 %1035, %v1018
      %v1037 = vpop.permute.xlu0 %1036
      %v1040 = vperm.slane %v1012, 0
      %v1041 = vperm.slane %v1012, 1
      %v1044 = vmul.f32 %v1022, %v1040
      %v1045 = vmul.f32 %v1022, %v1041
      %v1046 = vmul.f32 %v1027, %v1040
      %v1047 = vmul.f32 %v1027, %v1041
      %v1048 = vmul.f32 %v1032, %v1040
      %v1049 = vmul.f32 %v1032, %v1041
      %v1050 = vmul.f32 %v1037, %v1040
      %v1051 = vmul.f32 %v1037, %v1041
      %v1052 = vld [vmem:[%s4] sm:$0xff]
      %v1053 = vld [vmem:[%s4 + $0x8] sm:$0xff]
      %v1054 = vld [vmem:[%s4 + $0x10] sm:$0xff]
      %v1055 = vld [vmem:[%s4 + $0x18] sm:$0x7]
      %1057 = vset.pattern.permute.xlu0 0
      %1058 = vperm.xlu0 %1057, %v1052
      %v1059 = vpop.permute.xlu0 %1058
      %1062 = vset.pattern.permute.xlu0 0
      %1063 = vperm.xlu0 %1062, %v1053
      %v1064 = vpop.permute.xlu0 %1063
      %1067 = vset.pattern.permute.xlu0 0
      %1068 = vperm.xlu0 %1067, %v1054
      %v1069 = vpop.permute.xlu0 %1068
      %1072 = vset.pattern.permute.xlu0 0
      %1073 = vperm.xlu0 %1072, %v1055
      %v1074 = vpop.permute.xlu0 %1073
      %v1077 = vperm.slane %v1014, 0
      %v1078 = vperm.slane %v1014, 1
      %v1081 = vmul.f32 %v1059, %v1077
      %v1082 = vmul.f32 %v1059, %v1078
      %v1083 = vmul.f32 %v1064, %v1077
      %v1084 = vmul.f32 %v1064, %v1078
      %v1085 = vmul.f32 %v1069, %v1077
      %v1086 = vmul.f32 %v1069, %v1078
      %v1087 = vmul.f32 %v1074, %v1077
      %v1088 = vmul.f32 %v1074, %v1078
      %v1089 = vadd.f32 %v1044, %v1081
      %v1090 = vadd.f32 %v1045, %v1082
      %v1091 = vadd.f32 %v1046, %v1083
      %v1092 = vadd.f32 %v1047, %v1084
      %v1093 = vadd.f32 %v1048, %v1085
      %v1094 = vadd.f32 %v1049, %v1086
      %v1095 = vadd.f32 %v1050, %v1087
      %v1096 = vadd.f32 %v1051, %v1088
      %v1097 = vld [vmem:[%s5] sm:$0xff]
      %v1098 = vld [vmem:[%s5 + $0x8] sm:$0xff]
      %v1099 = vld [vmem:[%s5 + $0x10] sm:$0xff]
      %v1100 = vld [vmem:[%s5 + $0x18] sm:$0x7]
      %1102 = vset.pattern.permute.xlu0 0
      %1103 = vperm.xlu0 %1102, %v1097
      %v1104 = vpop.permute.xlu0 %1103
      %1107 = vset.pattern.permute.xlu0 0
      %1108 = vperm.xlu0 %1107, %v1098
      %v1109 = vpop.permute.xlu0 %1108
      %1112 = vset.pattern.permute.xlu0 0
      %1113 = vperm.xlu0 %1112, %v1099
      %v1114 = vpop.permute.xlu0 %1113
      %1117 = vset.pattern.permute.xlu0 0
      %1118 = vperm.xlu0 %1117, %v1100
      %v1119 = vpop.permute.xlu0 %1118
      %v1121 = vmul.f32 %v1104, %v597
      %v1122 = vmul.f32 %v1104, %v612
      %v1123 = vmul.f32 %v1109, %v627
      %v1124 = vmul.f32 %v1109, %v642
      %v1125 = vmul.f32 %v1114, %v657
      %v1126 = vmul.f32 %v1114, %v672
      %v1127 = vmul.f32 %v1119, %v687
      %v1128 = vmul.f32 %v1119, %v702
      %v1129 = vadd.f32 %v1089, %v1121
      %v1130 = vadd.f32 %v1090, %v1122
      %v1131 = vadd.f32 %v1091, %v1123
      %v1132 = vadd.f32 %v1092, %v1124
      %v1133 = vadd.f32 %v1093, %v1125
      %v1134 = vadd.f32 %v1094, %v1126
      %v1135 = vadd.f32 %v1095, %v1127
      %v1136 = vadd.f32 %v1096, %v1128
      %v1137 = vld [vmem:[%s6] sm:$0xff]
      %v1138 = vld [vmem:[%s6 + $0x8] sm:$0xff]
      %v1139 = vld [vmem:[%s6 + $0x10] sm:$0xff]
      %v1140 = vld [vmem:[%s6 + $0x18] sm:$0x7]
      %1142 = vset.pattern.permute.xlu0 0
      %1143 = vperm.xlu0 %1142, %v1137
      %v1144 = vpop.permute.xlu0 %1143
      %1147 = vset.pattern.permute.xlu0 0
      %1148 = vperm.xlu0 %1147, %v1138
      %v1149 = vpop.permute.xlu0 %1148
      %1152 = vset.pattern.permute.xlu0 0
      %1153 = vperm.xlu0 %1152, %v1139
      %v1154 = vpop.permute.xlu0 %1153
      %1157 = vset.pattern.permute.xlu0 0
      %1158 = vperm.xlu0 %1157, %v1140
      %v1159 = vpop.permute.xlu0 %1158
      %v1161 = vmul.f32 %v1144, %v997
      %v1162 = vmul.f32 %v1144, %v999
      %v1163 = vmul.f32 %v1149, %v1001
      %v1164 = vmul.f32 %v1149, %v1003
      %v1165 = vmul.f32 %v1154, %v1005
      %v1166 = vmul.f32 %v1154, %v1007
      %v1167 = vmul.f32 %v1159, %v1009
      %v1168 = vmul.f32 %v1159, %v1011
      %v1169 = vadd.f32 %v1129, %v1161
      %v1170 = vadd.f32 %v1130, %v1162
      %v1171 = vadd.f32 %v1131, %v1163
      %v1172 = vadd.f32 %v1132, %v1164
      %v1173 = vadd.f32 %v1133, %v1165
      %v1174 = vadd.f32 %v1134, %v1166
      %v1175 = vadd.f32 %v1135, %v1167
      %v1176 = vadd.f32 %v1136, %v1168
      %vm1177 = vcmp.gt.f32.partialorder %v719, 0.0
      %vm1178 = vcmp.gt.f32.partialorder %v720, 0.0
      %vm1179 = vcmp.gt.f32.partialorder %v721, 0.0
      %vm1180 = vcmp.gt.f32.partialorder %v722, 0.0
      %v1181 = vsel %vm1177, 1, 0
      %v1182 = vsel %vm1178, 1, 0
      %v1183 = vsel %vm1179, 1, 0
      %v1184 = vsel %vm1180, 1, 0
      %1185 = vset.pattern.permute.xlu0 0
      %1186 = vperm.xlu0 %1185, %v1181
      %v1187 = vpop.permute.xlu0 %1186
      %1188 = vset.pattern.permute.xlu0 0
      %1189 = vperm.xlu0 %1188, %v1182
      %v1190 = vpop.permute.xlu0 %1189
      %1191 = vset.pattern.permute.xlu0 0
      %1192 = vperm.xlu0 %1191, %v1183
      %v1193 = vpop.permute.xlu0 %1192
      %1194 = vset.pattern.permute.xlu0 0
      %1195 = vperm.xlu0 %1194, %v1184
      %v1196 = vpop.permute.xlu0 %1195
      %vm1197 = vcmp.eq.s32.totalorder %v1187, 1
      %vm1198 = vcmp.eq.s32.totalorder %v1190, 1
      %vm1199 = vcmp.eq.s32.totalorder %v1193, 1
      %vm1200 = vcmp.eq.s32.totalorder %v1196, 1
      %v1201 = vsel %vm1197, %v997, 0.0
      %v1202 = vsel %vm1197, %v999, 0.0
      %v1203 = vsel %vm1198, %v1001, 0.0
      %v1204 = vsel %vm1198, %v1003, 0.0
      %v1205 = vsel %vm1199, %v1005, 0.0
      %v1206 = vsel %vm1199, %v1007, 0.0
      %v1207 = vsel %vm1200, %v1009, 0.0
      %v1208 = vsel %vm1200, %v1011, 0.0
      %v1209 = vmul.f32 %v779, %v1201
      %v1210 = vmul.f32 %v779, %v1202
      %v1211 = vmul.f32 %v784, %v1203
      %v1212 = vmul.f32 %v784, %v1204
      %v1213 = vmul.f32 %v789, %v1205
      %v1214 = vmul.f32 %v789, %v1206
      %v1215 = vmul.f32 %v794, %v1207
      %v1216 = vmul.f32 %v794, %v1208
      %v1217 = vadd.f32 %v1209, %v1211
      %v1218 = vadd.f32 %v1217, %v1213
      %v1219 = vsel %vm756, %v1215, 0.0
      %v1220 = vadd.f32 %v1218, %v1219
      %v1221 = vrot.slane %v1220, 4
      %v1222 = vadd.f32 %v1220, %v1221
      %v1223 = vrot.slane %v1222, 2
      %v1224 = vadd.f32 %v1222, %v1223
      %v1225 = vrot.slane %v1224, 1
      %v1226 = vadd.f32 %v1224, %v1225
      %v1227 = vadd.f32 %v1210, %v1212
      %v1228 = vadd.f32 %v1227, %v1214
      %v1229 = vsel %vm756, %v1216, 0.0
      %v1230 = vadd.f32 %v1228, %v1229
      %v1231 = vrot.slane %v1230, 4
      %v1232 = vadd.f32 %v1230, %v1231
      %v1233 = vrot.slane %v1232, 2
      %v1234 = vadd.f32 %v1232, %v1233
      %v1235 = vrot.slane %v1234, 1
      %v1236 = vadd.f32 %v1234, %v1235
      %v1237 = vmul.f32 %v779, %v1226
      %v1238 = vmul.f32 %v779, %v1236
      %v1239 = vmul.f32 %v784, %v1226
      %v1240 = vmul.f32 %v784, %v1236
      %v1241 = vmul.f32 %v789, %v1226
      %v1242 = vmul.f32 %v789, %v1236
      %v1243 = vmul.f32 %v794, %v1226
      %v1244 = vmul.f32 %v794, %v1236
      %v1245 = vmul.f32 %v859, %v1201
      %v1246 = vmul.f32 %v859, %v1202
      %v1247 = vmul.f32 %v864, %v1203
      %v1248 = vmul.f32 %v864, %v1204
      %v1249 = vmul.f32 %v869, %v1205
      %v1250 = vmul.f32 %v869, %v1206
      %v1251 = vmul.f32 %v874, %v1207
      %v1252 = vmul.f32 %v874, %v1208
      %v1253 = vadd.f32 %v1245, %v1247
      %v1254 = vadd.f32 %v1253, %v1249
      %v1255 = vsel %vm756, %v1251, 0.0
      %v1256 = vadd.f32 %v1254, %v1255
      %v1257 = vrot.slane %v1256, 4
      %v1258 = vadd.f32 %v1256, %v1257
      %v1259 = vrot.slane %v1258, 2
      %v1260 = vadd.f32 %v1258, %v1259
      %v1261 = vrot.slane %v1260, 1
      %v1262 = vadd.f32 %v1260, %v1261
      %v1263 = vadd.f32 %v1246, %v1248
      %v1264 = vadd.f32 %v1263, %v1250
      %v1265 = vsel %vm756, %v1252, 0.0
      %v1266 = vadd.f32 %v1264, %v1265
      %v1267 = vrot.slane %v1266, 4
      %v1268 = vadd.f32 %v1266, %v1267
      %v1269 = vrot.slane %v1268, 2
      %v1270 = vadd.f32 %v1268, %v1269
      %v1271 = vrot.slane %v1270, 1
      %v1272 = vadd.f32 %v1270, %v1271
      %v1273 = vmul.f32 %v859, %v1262
      %v1274 = vmul.f32 %v859, %v1272
      %v1275 = vmul.f32 %v864, %v1262
      %v1276 = vmul.f32 %v864, %v1272
      %v1277 = vmul.f32 %v869, %v1262
      %v1278 = vmul.f32 %v869, %v1272
      %v1279 = vmul.f32 %v874, %v1262
      %v1280 = vmul.f32 %v874, %v1272
      %v1281 = vadd.f32 %v1237, %v1273
      %v1282 = vadd.f32 %v1238, %v1274
      %v1283 = vadd.f32 %v1239, %v1275
      %v1284 = vadd.f32 %v1240, %v1276
      %v1285 = vadd.f32 %v1241, %v1277
      %v1286 = vadd.f32 %v1242, %v1278
      %v1287 = vadd.f32 %v1243, %v1279
      %v1288 = vadd.f32 %v1244, %v1280
      %v1289 = vmul.f32 %v947, %v1201
      %v1290 = vmul.f32 %v947, %v1202
      %v1291 = vmul.f32 %v952, %v1203
      %v1292 = vmul.f32 %v952, %v1204
      %v1293 = vmul.f32 %v957, %v1205
      %v1294 = vmul.f32 %v957, %v1206
      %v1295 = vmul.f32 %v962, %v1207
      %v1296 = vmul.f32 %v962, %v1208
      %v1297 = vadd.f32 %v1289, %v1291
      %v1298 = vadd.f32 %v1297, %v1293
      %v1299 = vsel %vm756, %v1295, 0.0
      %v1300 = vadd.f32 %v1298, %v1299
      %v1301 = vrot.slane %v1300, 4
      %v1302 = vadd.f32 %v1300, %v1301
      %v1303 = vrot.slane %v1302, 2
      %v1304 = vadd.f32 %v1302, %v1303
      %v1305 = vrot.slane %v1304, 1
      %v1306 = vadd.f32 %v1304, %v1305
      %v1307 = vadd.f32 %v1290, %v1292
      %v1308 = vadd.f32 %v1307, %v1294
      %v1309 = vsel %vm756, %v1296, 0.0
      %v1310 = vadd.f32 %v1308, %v1309
      %v1311 = vrot.slane %v1310, 4
      %v1312 = vadd.f32 %v1310, %v1311
      %v1313 = vrot.slane %v1312, 2
      %v1314 = vadd.f32 %v1312, %v1313
      %v1315 = vrot.slane %v1314, 1
      %v1316 = vadd.f32 %v1314, %v1315
      %v1317 = vmul.f32 %v947, %v1306
      %v1318 = vmul.f32 %v947, %v1316
      %v1319 = vmul.f32 %v952, %v1306
      %v1320 = vmul.f32 %v952, %v1316
      %v1321 = vmul.f32 %v957, %v1306
      %v1322 = vmul.f32 %v957, %v1316
      %v1323 = vmul.f32 %v962, %v1306
      %v1324 = vmul.f32 %v962, %v1316
      %v1325 = vadd.f32 %v1281, %v1317
      %v1326 = vadd.f32 %v1282, %v1318
      %v1327 = vadd.f32 %v1283, %v1319
      %v1328 = vadd.f32 %v1284, %v1320
      %v1329 = vadd.f32 %v1285, %v1321
      %v1330 = vadd.f32 %v1286, %v1322
      %v1331 = vadd.f32 %v1287, %v1323
      %v1332 = vadd.f32 %v1288, %v1324
      %v1333 = vsub.f32 1.0, %v719
      %v1334 = vsub.f32 1.0, %v720
      %v1335 = vsub.f32 1.0, %v721
      %v1336 = vsub.f32 1.0, %v722
      %1338 = vset.pattern.permute.xlu0 0
      %1339 = vperm.xlu0 %1338, %v1333
      %v1340 = vpop.permute.xlu0 %1339
      %1343 = vset.pattern.permute.xlu0 0
      %1344 = vperm.xlu0 %1343, %v1334
      %v1345 = vpop.permute.xlu0 %1344
      %1348 = vset.pattern.permute.xlu0 0
      %1349 = vperm.xlu0 %1348, %v1335
      %v1350 = vpop.permute.xlu0 %1349
      %1353 = vset.pattern.permute.xlu0 0
      %1354 = vperm.xlu0 %1353, %v1336
      %v1355 = vpop.permute.xlu0 %1354
      %v1357 = vadd.f32 %v1325, %v1340
      %v1358 = vadd.f32 %v1326, %v1340
      %v1359 = vadd.f32 %v1327, %v1345
      %v1360 = vadd.f32 %v1328, %v1345
      %v1361 = vadd.f32 %v1329, %v1350
      %v1362 = vadd.f32 %v1330, %v1350
      %v1363 = vadd.f32 %v1331, %v1355
      %v1364 = vadd.f32 %v1332, %v1355
      %v1365 = vrcp.pop %v1357
      %v1366 = vmul.f32 %v1357, %v1365
      %v1367 = vsub.f32 1.0, %v1366
      %v1368 = vmul.f32 %v1365, %v1367
      %v1369 = vadd.f32 %v1365, %v1368
      %vm1370 = vweird.f32 %v1357
      %vm1371 = vweird.f32 %v1365
      %vm1372 = vmor %vm1370, %vm1371
      %v1373 = vsel %vm1372, %v1365, %v1369
      %v1374 = vand.u32 2147483647, %v1357
      %vm1375 = vcmp.eq.f32.partialorder %v1374, 8.507059e+37
      %v1376 = vand.u32 %v1357, 2147483648
      %v1377 = vor.u32 1.1754944e-38, %v1376
      %v1378 = vsel %vm1375, %v1377, %v1373
      %v1379 = vmul.f32 %v1201, %v1378
      %v1380 = vrcp.pop %v1358
      %v1381 = vmul.f32 %v1358, %v1380
      %v1382 = vsub.f32 1.0, %v1381
      %v1383 = vmul.f32 %v1380, %v1382
      %v1384 = vadd.f32 %v1380, %v1383
      %vm1385 = vweird.f32 %v1358
      %vm1386 = vweird.f32 %v1380
      %vm1387 = vmor %vm1385, %vm1386
      %v1388 = vsel %vm1387, %v1380, %v1384
      %v1389 = vand.u32 2147483647, %v1358
      %vm1390 = vcmp.eq.f32.partialorder %v1389, 8.507059e+37
      %v1391 = vand.u32 %v1358, 2147483648
      %v1392 = vor.u32 1.1754944e-38, %v1391
      %v1393 = vsel %vm1390, %v1392, %v1388
      %v1394 = vmul.f32 %v1202, %v1393
      %v1395 = vrcp.pop %v1359
      %v1396 = vmul.f32 %v1359, %v1395
      %v1397 = vsub.f32 1.0, %v1396
      %v1398 = vmul.f32 %v1395, %v1397
      %v1399 = vadd.f32 %v1395, %v1398
      %vm1400 = vweird.f32 %v1359
      %vm1401 = vweird.f32 %v1395
      %vm1402 = vmor %vm1400, %vm1401
      %v1403 = vsel %vm1402, %v1395, %v1399
      %v1404 = vand.u32 2147483647, %v1359
      %vm1405 = vcmp.eq.f32.partialorder %v1404, 8.507059e+37
      %v1406 = vand.u32 %v1359, 2147483648
      %v1407 = vor.u32 1.1754944e-38, %v1406
      %v1408 = vsel %vm1405, %v1407, %v1403
      %v1409 = vmul.f32 %v1203, %v1408
      %v1410 = vrcp.pop %v1360
      %v1411 = vmul.f32 %v1360, %v1410
      %v1412 = vsub.f32 1.0, %v1411
      %v1413 = vmul.f32 %v1410, %v1412
      %v1414 = vadd.f32 %v1410, %v1413
      %vm1415 = vweird.f32 %v1360
      %vm1416 = vweird.f32 %v1410
      %vm1417 = vmor %vm1415, %vm1416
      %v1418 = vsel %vm1417, %v1410, %v1414
      %v1419 = vand.u32 2147483647, %v1360
      %vm1420 = vcmp.eq.f32.partialorder %v1419, 8.507059e+37
      %v1421 = vand.u32 %v1360, 2147483648
      %v1422 = vor.u32 1.1754944e-38, %v1421
      %v1423 = vsel %vm1420, %v1422, %v1418
      %v1424 = vmul.f32 %v1204, %v1423
      %v1425 = vrcp.pop %v1361
      %v1426 = vmul.f32 %v1361, %v1425
      %v1427 = vsub.f32 1.0, %v1426
      %v1428 = vmul.f32 %v1425, %v1427
      %v1429 = vadd.f32 %v1425, %v1428
      %vm1430 = vweird.f32 %v1361
      %vm1431 = vweird.f32 %v1425
      %vm1432 = vmor %vm1430, %vm1431
      %v1433 = vsel %vm1432, %v1425, %v1429
      %v1434 = vand.u32 2147483647, %v1361
      %vm1435 = vcmp.eq.f32.partialorder %v1434, 8.507059e+37
      %v1436 = vand.u32 %v1361, 2147483648
      %v1437 = vor.u32 1.1754944e-38, %v1436
      %v1438 = vsel %vm1435, %v1437, %v1433
      %v1439 = vmul.f32 %v1205, %v1438
      %v1440 = vrcp.pop %v1362
      %v1441 = vmul.f32 %v1362, %v1440
      %v1442 = vsub.f32 1.0, %v1441
      %v1443 = vmul.f32 %v1440, %v1442
      %v1444 = vadd.f32 %v1440, %v1443
      %vm1445 = vweird.f32 %v1362
      %vm1446 = vweird.f32 %v1440
      %vm1447 = vmor %vm1445, %vm1446
      %v1448 = vsel %vm1447, %v1440, %v1444
      %v1449 = vand.u32 2147483647, %v1362
      %vm1450 = vcmp.eq.f32.partialorder %v1449, 8.507059e+37
      %v1451 = vand.u32 %v1362, 2147483648
      %v1452 = vor.u32 1.1754944e-38, %v1451
      %v1453 = vsel %vm1450, %v1452, %v1448
      %v1454 = vmul.f32 %v1206, %v1453
      %v1455 = vrcp.pop %v1363
      %v1456 = vmul.f32 %v1363, %v1455
      %v1457 = vsub.f32 1.0, %v1456
      %v1458 = vmul.f32 %v1455, %v1457
      %v1459 = vadd.f32 %v1455, %v1458
      %vm1460 = vweird.f32 %v1363
      %vm1461 = vweird.f32 %v1455
      %vm1462 = vmor %vm1460, %vm1461
      %v1463 = vsel %vm1462, %v1455, %v1459
      %v1464 = vand.u32 2147483647, %v1363
      %vm1465 = vcmp.eq.f32.partialorder %v1464, 8.507059e+37
      %v1466 = vand.u32 %v1363, 2147483648
      %v1467 = vor.u32 1.1754944e-38, %v1466
      %v1468 = vsel %vm1465, %v1467, %v1463
      %v1469 = vmul.f32 %v1207, %v1468
      %v1470 = vrcp.pop %v1364
      %v1471 = vmul.f32 %v1364, %v1470
      %v1472 = vsub.f32 1.0, %v1471
      %v1473 = vmul.f32 %v1470, %v1472
      %v1474 = vadd.f32 %v1470, %v1473
      %vm1475 = vweird.f32 %v1364
      %vm1476 = vweird.f32 %v1470
      %vm1477 = vmor %vm1475, %vm1476
      %v1478 = vsel %vm1477, %v1470, %v1474
      %v1479 = vand.u32 2147483647, %v1364
      %vm1480 = vcmp.eq.f32.partialorder %v1479, 8.507059e+37
      %v1481 = vand.u32 %v1364, 2147483648
      %v1482 = vor.u32 1.1754944e-38, %v1481
      %v1483 = vsel %vm1480, %v1482, %v1478
      %v1484 = vmul.f32 %v1208, %v1483
      %v1485 = vadd.f32 %v1169, %v1379
      %v1486 = vadd.f32 %v1170, %v1394
      %v1487 = vadd.f32 %v1171, %v1409
      %v1488 = vadd.f32 %v1172, %v1424
      %v1489 = vadd.f32 %v1173, %v1439
      %v1490 = vadd.f32 %v1174, %v1454
      %v1491 = vadd.f32 %v1175, %v1469
      %v1492 = vadd.f32 %v1176, %v1484
      %1493 = vst [vmem:[%s446] sm:$0xff] %v1485
      %1494 = vst [vmem:[%s446 + $0x8] sm:$0xff] %v1486
      %1495 = vst [vmem:[%s446 + $0x10] sm:$0xff] %v1487
      %1496 = vst [vmem:[%s446 + $0x18] sm:$0xff] %v1488
      %1497 = vst [vmem:[%s446 + $0x20] sm:$0xff] %v1489
      %1498 = vst [vmem:[%s446 + $0x28] sm:$0xff] %v1490
      %1499 = vst [vmem:[%s446 + $0x30] sm:$0x7] %v1491
      %1500 = vst [vmem:[%s446 + $0x38] sm:$0x7] %v1492
      %s1501 = smul.u32 2, %s27
      %p1502 = scmp.lt.s32.totalorder %s26, 1
      %s1503 = scalar_select %p1502, %s26, 1
      %p1504 = scmp.lt.s32.totalorder %s1501, 1
      %s1505 = scalar_select %p1504, %s1501, 1
      %s1506 = smul.addr %s1503, 8
      %s1507 = sadd.s32 %s1505, %s1506
      %s1508 = smul.addr %s1507, 8
      %s1509 = scalar_lea.vmem %s11, %s1508
      // Predicated region
      $region65: #{tpu_custom_call.1} parent=63 // pred_check
        %p1510 = pneg %p297
      $region66: #{tpu_custom_call.1} parent=63 // pred_check_branch
        %1512 = sbr.rel (%p1510) target = $region68
      $region67: #{tpu_custom_call.1} parent=63 // pred_region
        %s1513 = smul.u32 2, %s27
      $region68: #{tpu_custom_call.1} parent=63 // pred_fallthru
        _
    $region64: #{tpu_custom_call.1} parent=5 // pred_fallthru
      _
    %p1514 = scmp.le.s32.totalorder 2, %s17
    // Predicated region
    $region69: #{tpu_custom_call.1} parent=5 // pred_check
      %p1515 = pneg %p1514
    $region70: #{tpu_custom_call.1} parent=5 // pred_check_branch
      %1517 = sbr.rel (%p1515) target = $region72
    $region71: #{tpu_custom_call.1} parent=5 // pred_region
      %s1518 = ssub.s32 %s17, 2
      // Predicated region
      $region73: #{tpu_custom_call.1} parent=71 // pred_check
        %p1519 = pneg %p303
      $region74: #{tpu_custom_call.1} parent=71 // pred_check_branch
        %1521 = sbr.rel (%p1519) target = $region76
      $region75: #{tpu_custom_call.1} parent=71 // pred_region
        %s1522 = smul.u32 2, %s29
        %p1523 = scmp.lt.s32.totalorder %s28, 1
        %s1524 = scalar_select %p1523, %s28, 1
        %p1525 = scmp.lt.s32.totalorder %s1522, 1
        %s1526 = scalar_select %p1525, %s1522, 1
        %s1527 = smul.addr %s1524, 8
        %s1528 = sadd.s32 %s1526, %s1527
        %s1529 = smul.addr %s1528, 8
        %s1530 = scalar_lea.vmem %s11, %s1529
      $region76: #{tpu_custom_call.1} parent=71 // pred_fallthru
        _
    $region72: #{tpu_custom_call.1} parent=5 // pred_fallthru
      _
  $region6: #{tpu_custom_call.1} parent=0 // loop_footer
    %s21 = sadd.s32 1, %s17
  $region7: #{tpu_custom_call.1} parent=0 // loop_footer_branch
    %16 = sbr.rel target = $region3
  $region8: #{tpu_custom_call.1} parent=0 // loop_exit
    _

</llo_original>
